<compile_context>
chip_gen: v7x
topology: tpu7x:2x2x1
jax: 0.10.0
libtpu: 0.0.40
codegen_flags: <defaults>
</compile_context>

<pallas_src>
import jax
import jax.numpy as jnp
from jax.experimental import pallas as pl
from jax.experimental.pallas import tpu as pltpu

F_IN = 969       # raw feature width
K_PAD = 1024     # first-layer contraction dim, padded to a multiple of 128
OUT_PAD = 128    # 64-wide head padded to a lane-dense 128 columns
H1, H2, H3, H4 = 512, 256, 128, 64


def _round_up(x, m):
    return (x + m - 1) // m * m


def _mlp_kernel(x_ref,
                w1_ref, b1_ref,
                w2_ref, b2_ref,
                w3_ref, b3_ref,
                w4_ref, b4_ref,
                o_ref,
                xs_ref):
    # In-kernel cast + zero-pad of the raw f32 (tm, 969) tile into a
    # (tm, 1024) bf16 VMEM scratch so the first MXU pass is full-width.
    # Re-done every grid step: under "parallel" semantics each TensorCore owns
    # a disjoint slice of the grid, so a one-time (program_id==0) init of the
    # persistent scratch would be unsafe.
    xs_ref[...] = jnp.zeros_like(xs_ref)
    xs_ref[:, :F_IN] = x_ref[...].astype(jnp.bfloat16)

    # 4 matmuls (bf16 operands, f32 accumulate) + bias + ReLU, all in VMEM.
    h = jnp.dot(xs_ref[...], w1_ref[...], preferred_element_type=jnp.float32)
    h = jnp.maximum(h + b1_ref[...], 0.0).astype(jnp.bfloat16)

    h = jnp.dot(h, w2_ref[...], preferred_element_type=jnp.float32)
    h = jnp.maximum(h + b2_ref[...], 0.0).astype(jnp.bfloat16)

    h = jnp.dot(h, w3_ref[...], preferred_element_type=jnp.float32)
    h = jnp.maximum(h + b3_ref[...], 0.0).astype(jnp.bfloat16)

    h = jnp.dot(h, w4_ref[...], preferred_element_type=jnp.float32)
    o_ref[...] = (h + b4_ref[...]).astype(o_ref.dtype)


def siamese_forward(x, params, *, tm=None):
    """x: (B, 969) float32.  params: bf16 transposed/padded weights + f32 biases.

    Returns (B, 64) float32 embeddings.
    """
    B, F = x.shape
    assert F == F_IN, f"expected {F_IN}-wide features, got {F}"
    w1, b1, w2, b2, w3, b3, w4, b4 = (
        params["w1"], params["b1"], params["w2"], params["b2"],
        params["w3"], params["b3"], params["w4"], params["b4"],
    )

    # Batch tile: 16-row aligned, at least 2 tiles whenever B > 16 (v7x dual
    # TensorCore), capped at 512 rows (per-step overhead amortized, ~11 MiB
    # VMEM footprint).
    if tm is None:
        if B <= 16:
            tm = 16
        else:
            tm = min(512, _round_up(pl.cdiv(B, 2), 16))
    grid = (pl.cdiv(B, tm),)

    # Constant block index -> DMA'd once, VMEM-resident across all batch
    # tiles; single-buffered since the block never changes.
    def _const(shape):
        return pl.BlockSpec(shape, lambda i: (0,) * len(shape),
                            pipeline_mode=pl.Buffered(1))

    flops = 2 * B * (K_PAD * H1 + H1 * H2 + H2 * H3 + H3 * OUT_PAD)
    weight_bytes = 2 * (K_PAD * H1 + H1 * H2 + H2 * H3 + H3 * OUT_PAD)
    bias_bytes = 4 * (H1 + H2 + H3 + OUT_PAD)
    bytes_accessed = (weight_bytes + bias_bytes
                      + B * F_IN * 4 + B * OUT_PAD * 4)

    out = pl.pallas_call(
        _mlp_kernel,
        out_shape=jax.ShapeDtypeStruct((B, OUT_PAD), jnp.float32),
        grid_spec=pltpu.PrefetchScalarGridSpec(
            num_scalar_prefetch=0,
            grid=grid,
            in_specs=[
                # Raw f32 input, full (969) last dim; cast/pad happens in-kernel.
                pl.BlockSpec((tm, F_IN), lambda i: (i, 0)),
                _const(w1.shape), _const(b1.shape),
                _const(w2.shape), _const(b2.shape),
                _const(w3.shape), _const(b3.shape),
                _const(w4.shape), _const(b4.shape),
            ],
            out_specs=pl.BlockSpec((tm, OUT_PAD), lambda i: (i, 0)),
            scratch_shapes=[pltpu.VMEM((tm, K_PAD), jnp.bfloat16)],
        ),
        compiler_params=pltpu.CompilerParams(
            dimension_semantics=("parallel",),
            vmem_limit_bytes=32 * 1024 * 1024,
        ),
        cost_estimate=pl.CostEstimate(
            flops=flops, transcendentals=0, bytes_accessed=bytes_accessed),
    )(x, w1, b1, w2, b2, w3, b3, w4, b4)

    # Drop the zero-padded output columns (64 -> OUT_PAD).
    return out[:, :H4]


def init_params(key):
    """Deterministic init mimicking PyTorch nn.Linear default (uniform ±1/sqrt(fan_in)).

    Weights stored transposed (in_features, out_features), cast to bf16.
    w1 zero-padded along K (969 -> 1024); w4/b4 zero-padded along the output
    dim (64 -> 128) so the kernel's output store is lane-dense.
    """
    dims = [(F_IN, H1), (H1, H2), (H2, H3), (H3, H4)]
    params = {}
    for i, (fan_in, fan_out) in enumerate(dims, start=1):
        key, kw, kb = jax.random.split(key, 3)
        bound = 1.0 / jnp.sqrt(fan_in)
        w = jax.random.uniform(kw, (fan_in, fan_out), dtype=jnp.float32,
                               minval=-bound, maxval=bound)
        b = jax.random.uniform(kb, (1, fan_out), dtype=jnp.float32,
                               minval=-bound, maxval=bound)
        if i == 1:
            w = jnp.pad(w, ((0, K_PAD - fan_in), (0, 0)))
        if i == 4:
            w = jnp.pad(w, ((0, 0), (0, OUT_PAD - fan_out)))
            b = jnp.pad(b, ((0, 0), (0, OUT_PAD - fan_out)))
        params[f"w{i}"] = w.astype(jnp.bfloat16)
        params[f"b{i}"] = b  # biases stay f32
    return params


def reference_forward(x, params):
    """Pure-JAX reference mirroring the kernel's bf16/f32 mixed precision."""
    h = jnp.pad(x.astype(jnp.bfloat16), ((0, 0), (0, K_PAD - x.shape[1])))
    h = jnp.dot(h, params["w1"], preferred_element_type=jnp.float32) + params["b1"]
    h = jnp.maximum(h, 0.0).astype(jnp.bfloat16)
    h = jnp.dot(h, params["w2"], preferred_element_type=jnp.float32) + params["b2"]
    h = jnp.maximum(h, 0.0).astype(jnp.bfloat16)
    h = jnp.dot(h, params["w3"], preferred_element_type=jnp.float32) + params["b3"]
    h = jnp.maximum(h, 0.0).astype(jnp.bfloat16)
    h = jnp.dot(h, params["w4"], preferred_element_type=jnp.float32) + params["b4"]
    return h[:, :H4]


if __name__ == "__main__":
    key = jax.random.PRNGKey(0)
    key, kx = jax.random.split(key)

    # 24 rows: > 16 so the grid has 2 tiles (dual-TC path) and the last tile
    # is ragged (exercises masked output writes, no host-side batch padding).
    batch = 24
    x = jax.random.normal(kx, (batch, F_IN), dtype=jnp.float32)
    params = init_params(key)

    out = siamese_forward(x, params)
    out = jax.block_until_ready(out)

    ref = reference_forward(x, params)
    assert out.shape == (batch, 64), out.shape
    assert jnp.allclose(out, ref, atol=2e-3, rtol=2e-3), "mismatch vs reference"

    print("KERNEL_OK")
</pallas_src>

<mosaic_0001>
module attributes {stable_mosaic.version = 11 : i64} {
  func.func @_mlp_kernel(%arg0: i32, %arg1: memref<16x969xf32, #tpu.memory_space<vmem>>, %arg2: memref<1024x512xbf16, #tpu.memory_space<vmem>>, %arg3: memref<1x512xf32, #tpu.memory_space<vmem>>, %arg4: memref<512x256xbf16, #tpu.memory_space<vmem>>, %arg5: memref<1x256xf32, #tpu.memory_space<vmem>>, %arg6: memref<256x128xbf16, #tpu.memory_space<vmem>>, %arg7: memref<1x128xf32, #tpu.memory_space<vmem>>, %arg8: memref<128x128xbf16, #tpu.memory_space<vmem>>, %arg9: memref<1x128xf32, #tpu.memory_space<vmem>>, %arg10: memref<16x128xf32, #tpu.memory_space<vmem>>, %arg11: memref<16x1024xbf16, #tpu.memory_space<vmem>>) attributes {dimension_semantics = [#tpu.dimension_semantics<parallel>], iteration_bounds = array<i64: 2>, scalar_prefetch = 0 : i64, scratch_operands = 1 : i64, tpu.core_type = #tpu.core_type<tc>, window_params = [{transform_indices = @transform_0, window_bounds = array<i64: 16, 969>}, {pipeline_mode = #tpu.pipeline_mode<synchronous>, transform_indices = @transform_1, window_bounds = array<i64: 1024, 512>}, {pipeline_mode = #tpu.pipeline_mode<synchronous>, transform_indices = @transform_2, window_bounds = array<i64: 1, 512>}, {pipeline_mode = #tpu.pipeline_mode<synchronous>, transform_indices = @transform_3, window_bounds = array<i64: 512, 256>}, {pipeline_mode = #tpu.pipeline_mode<synchronous>, transform_indices = @transform_4, window_bounds = array<i64: 1, 256>}, {pipeline_mode = #tpu.pipeline_mode<synchronous>, transform_indices = @transform_5, window_bounds = array<i64: 256, 128>}, {pipeline_mode = #tpu.pipeline_mode<synchronous>, transform_indices = @transform_6, window_bounds = array<i64: 1, 128>}, {pipeline_mode = #tpu.pipeline_mode<synchronous>, transform_indices = @transform_7, window_bounds = array<i64: 128, 128>}, {pipeline_mode = #tpu.pipeline_mode<synchronous>, transform_indices = @transform_8, window_bounds = array<i64: 1, 128>}, {transform_indices = @transform_9, window_bounds = array<i64: 16, 128>}]} {
    %cst = arith.constant 0.000000e+00 : bf16
    %0 = vector.broadcast %cst : bf16 to vector<16x1024xbf16>
    %c0 = arith.constant 0 : index
    %c0_0 = arith.constant 0 : index
    %1 = vector.load %arg11[%c0, %c0_0] : memref<16x1024xbf16, #tpu.memory_space<vmem>>, vector<16x1024xbf16>
    tpu.vector_store %arg11[%c0, %c0_0], %0 {strides = array<i32>} : memref<16x1024xbf16, #tpu.memory_space<vmem>>, vector<16x1024xbf16>,
    %c0_1 = arith.constant 0 : index
    %c0_2 = arith.constant 0 : index
    %2 = vector.load %arg1[%c0_1, %c0_2] : memref<16x969xf32, #tpu.memory_space<vmem>>, vector<16x969xf32>
    %3 = arith.truncf %2 : vector<16x969xf32> to vector<16x969xbf16>
    %c0_3 = arith.constant 0 : index
    %c0_4 = arith.constant 0 : index
    %4 = vector.load %arg11[%c0_3, %c0_4] : memref<16x1024xbf16, #tpu.memory_space<vmem>>, vector<16x969xbf16>
    tpu.vector_store %arg11[%c0_3, %c0_4], %3 {strides = array<i32>} : memref<16x1024xbf16, #tpu.memory_space<vmem>>, vector<16x969xbf16>,
    %c0_5 = arith.constant 0 : index
    %c0_6 = arith.constant 0 : index
    %5 = vector.load %arg11[%c0_5, %c0_6] : memref<16x1024xbf16, #tpu.memory_space<vmem>>, vector<16x1024xbf16>
    %c0_7 = arith.constant 0 : index
    %c0_8 = arith.constant 0 : index
    %6 = vector.load %arg2[%c0_7, %c0_8] : memref<1024x512xbf16, #tpu.memory_space<vmem>>, vector<1024x512xbf16>
    %cst_9 = arith.constant dense<0.000000e+00> : vector<16x512xf32>
    %7 = tpu.matmul %5, %6, %cst_9 {dimension_numbers = #tpu.dot_dimension_numbers<[1], [0], [0], [1], [0, 0, 1, 1], [], []>} : vector<16x1024xbf16>, vector<1024x512xbf16>, vector<16x512xf32> -> vector<16x512xf32>
    %c0_10 = arith.constant 0 : index
    %c0_11 = arith.constant 0 : index
    %8 = vector.load %arg3[%c0_10, %c0_11] : memref<1x512xf32, #tpu.memory_space<vmem>>, vector<1x512xf32>
    %9 = vector.broadcast %8 : vector<1x512xf32> to vector<16x512xf32>
    %10 = arith.addf %7, %9 : vector<16x512xf32>
    %cst_12 = arith.constant 0.000000e+00 : f32
    %11 = vector.broadcast %cst_12 : f32 to vector<16x512xf32>
    %12 = arith.maximumf %10, %11 : vector<16x512xf32>
    %13 = arith.truncf %12 : vector<16x512xf32> to vector<16x512xbf16>
    %c0_13 = arith.constant 0 : index
    %c0_14 = arith.constant 0 : index
    %14 = vector.load %arg4[%c0_13, %c0_14] : memref<512x256xbf16, #tpu.memory_space<vmem>>, vector<512x256xbf16>
    %cst_15 = arith.constant dense<0.000000e+00> : vector<16x256xf32>
    %15 = tpu.matmul %13, %14, %cst_15 {dimension_numbers = #tpu.dot_dimension_numbers<[1], [0], [0], [1], [0, 0, 1, 1], [], []>} : vector<16x512xbf16>, vector<512x256xbf16>, vector<16x256xf32> -> vector<16x256xf32>
    %c0_16 = arith.constant 0 : index
    %c0_17 = arith.constant 0 : index
    %16 = vector.load %arg5[%c0_16, %c0_17] : memref<1x256xf32, #tpu.memory_space<vmem>>, vector<1x256xf32>
    %17 = vector.broadcast %16 : vector<1x256xf32> to vector<16x256xf32>
    %18 = arith.addf %15, %17 : vector<16x256xf32>
    %cst_18 = arith.constant 0.000000e+00 : f32
    %19 = vector.broadcast %cst_18 : f32 to vector<16x256xf32>
    %20 = arith.maximumf %18, %19 : vector<16x256xf32>
    %21 = arith.truncf %20 : vector<16x256xf32> to vector<16x256xbf16>
    %c0_19 = arith.constant 0 : index
    %c0_20 = arith.constant 0 : index
    %22 = vector.load %arg6[%c0_19, %c0_20] : memref<256x128xbf16, #tpu.memory_space<vmem>>, vector<256x128xbf16>
    %cst_21 = arith.constant dense<0.000000e+00> : vector<16x128xf32>
    %23 = tpu.matmul %21, %22, %cst_21 {dimension_numbers = #tpu.dot_dimension_numbers<[1], [0], [0], [1], [0, 0, 1, 1], [], []>} : vector<16x256xbf16>, vector<256x128xbf16>, vector<16x128xf32> -> vector<16x128xf32>
    %c0_22 = arith.constant 0 : index
    %c0_23 = arith.constant 0 : index
    %24 = vector.load %arg7[%c0_22, %c0_23] : memref<1x128xf32, #tpu.memory_space<vmem>>, vector<1x128xf32>
    %25 = vector.broadcast %24 : vector<1x128xf32> to vector<16x128xf32>
    %26 = arith.addf %23, %25 : vector<16x128xf32>
    %cst_24 = arith.constant 0.000000e+00 : f32
    %27 = vector.broadcast %cst_24 : f32 to vector<16x128xf32>
    %28 = arith.maximumf %26, %27 : vector<16x128xf32>
    %29 = arith.truncf %28 : vector<16x128xf32> to vector<16x128xbf16>
    %c0_25 = arith.constant 0 : index
    %c0_26 = arith.constant 0 : index
    %30 = vector.load %arg8[%c0_25, %c0_26] : memref<128x128xbf16, #tpu.memory_space<vmem>>, vector<128x128xbf16>
    %cst_27 = arith.constant dense<0.000000e+00> : vector<16x128xf32>
    %31 = tpu.matmul %29, %30, %cst_27 {dimension_numbers = #tpu.dot_dimension_numbers<[1], [0], [0], [1], [0, 0, 1, 1], [], []>} : vector<16x128xbf16>, vector<128x128xbf16>, vector<16x128xf32> -> vector<16x128xf32>
    %c0_28 = arith.constant 0 : index
    %c0_29 = arith.constant 0 : index
    %32 = vector.load %arg9[%c0_28, %c0_29] : memref<1x128xf32, #tpu.memory_space<vmem>>, vector<1x128xf32>
    %33 = vector.broadcast %32 : vector<1x128xf32> to vector<16x128xf32>
    %34 = arith.addf %31, %33 : vector<16x128xf32>
    %c0_30 = arith.constant 0 : index
    %c0_31 = arith.constant 0 : index
    %35 = vector.load %arg10[%c0_30, %c0_31] : memref<16x128xf32, #tpu.memory_space<vmem>>, vector<16x128xf32>
    tpu.vector_store %arg10[%c0_30, %c0_31], %34 {strides = array<i32>} : memref<16x128xf32, #tpu.memory_space<vmem>>, vector<16x128xf32>,
    return
  }
  func.func @transform_0(%arg0: i32) -> (i32, i32) {
    %c0_i32 = arith.constant 0 : i32
    %c0_i32_0 = arith.constant 0 : i32
    return %arg0, %c0_i32 : i32, i32
  }
  func.func @transform_1(%arg0: i32) -> (i32, i32) {
    %c0_i32 = arith.constant 0 : i32
    %c0_i32_0 = arith.constant 0 : i32
    %c0_i32_1 = arith.constant 0 : i32
    return %c0_i32, %c0_i32_0 : i32, i32
  }
  func.func @transform_2(%arg0: i32) -> (i32, i32) {
    %c0_i32 = arith.constant 0 : i32
    %c0_i32_0 = arith.constant 0 : i32
    %c0_i32_1 = arith.constant 0 : i32
    return %c0_i32, %c0_i32_0 : i32, i32
  }
  func.func @transform_3(%arg0: i32) -> (i32, i32) {
    %c0_i32 = arith.constant 0 : i32
    %c0_i32_0 = arith.constant 0 : i32
    %c0_i32_1 = arith.constant 0 : i32
    return %c0_i32, %c0_i32_0 : i32, i32
  }
  func.func @transform_4(%arg0: i32) -> (i32, i32) {
    %c0_i32 = arith.constant 0 : i32
    %c0_i32_0 = arith.constant 0 : i32
    %c0_i32_1 = arith.constant 0 : i32
    return %c0_i32, %c0_i32_0 : i32, i32
  }
  func.func @transform_5(%arg0: i32) -> (i32, i32) {
    %c0_i32 = arith.constant 0 : i32
    %c0_i32_0 = arith.constant 0 : i32
    %c0_i32_1 = arith.constant 0 : i32
    return %c0_i32, %c0_i32_0 : i32, i32
  }
  func.func @transform_6(%arg0: i32) -> (i32, i32) {
    %c0_i32 = arith.constant 0 : i32
    %c0_i32_0 = arith.constant 0 : i32
    %c0_i32_1 = arith.constant 0 : i32
    return %c0_i32, %c0_i32_0 : i32, i32
  }
  func.func @transform_7(%arg0: i32) -> (i32, i32) {
    %c0_i32 = arith.constant 0 : i32
    %c0_i32_0 = arith.constant 0 : i32
    %c0_i32_1 = arith.constant 0 : i32
    return %c0_i32, %c0_i32_0 : i32, i32
  }
  func.func @transform_8(%arg0: i32) -> (i32, i32) {
    %c0_i32 = arith.constant 0 : i32
    %c0_i32_0 = arith.constant 0 : i32
    %c0_i32_1 = arith.constant 0 : i32
    return %c0_i32, %c0_i32_0 : i32, i32
  }
  func.func @transform_9(%arg0: i32) -> (i32, i32) {
    %c0_i32 = arith.constant 0 : i32
    %c0_i32_0 = arith.constant 0 : i32
    return %arg0, %c0_i32 : i32, i32
  }
}

</mosaic_0001>

<llo_original>
// kernel: tpu_custom_call.1
$region0: #{tpu_custom_call.1}
  #allocation0 [shape = 'u32[]', space=smem, size = 0x4, offset = 0x4, fixed_abs, tag = 'smem constant byte address 0x4 - core index']
  #allocation1 [shape = 'u32[144,128]{1,0:T(1,128)}', space=vmem, size = 0x12000, scoped, tag = 'internal scratch']
  #allocation2 [shape = 'bf16[16,1024]{1,0:T(16,128)(2,1)}', space=vmem, size = 0x8000, scoped, tag = 'scratch operand']
  %s0 = inlined_call_operand.hbm [shape: f32[24,969], index: 0, kind: input, shape index: {}]
  %s1 = inlined_call_operand.hbm [shape: bf16[1024,512], index: 1, kind: input, shape index: {}]
  %s2 = inlined_call_operand.vmem [shape: f32[1,512], index: 2, kind: input, shape index: {}]
  %s3 = inlined_call_operand.hbm [shape: bf16[512,256], index: 3, kind: input, shape index: {}]
  %s4 = inlined_call_operand.vmem [shape: f32[1,256], index: 4, kind: input, shape index: {}]
  %s5 = inlined_call_operand.hbm [shape: bf16[256,128], index: 5, kind: input, shape index: {}]
  %s6 = inlined_call_operand.vmem [shape: f32[1,128], index: 6, kind: input, shape index: {}]
  %s7 = inlined_call_operand.hbm [shape: bf16[128,128], index: 7, kind: input, shape index: {}]
  %s8 = inlined_call_operand.vmem [shape: f32[1,128], index: 8, kind: input, shape index: {}]
  %s9 = inlined_call_operand.hbm [shape: f32[24,128], index: 9, kind: output, shape index: {}]
  %s10 = sld [smem:[#allocation0]]
  $region89: #{tpu_custom_call.1} parent=0
    _
  %s12 = ssub.s32 1, %s10
  %s13 = scalar_select 0, %s12, %s10
  $region1: #{tpu_custom_call.1} parent=0
    #allocation3 [shape = 'u8[131072]{0}', space=vmem, size = 0x20000, scoped, tag = 'input window, operand 0']
    #allocation4 [shape = 's32[2]{0}', space=sflag, size = 0x8, scoped, tag = 'scoped memory for tpu_custom_call.1']
    #allocation5 [shape = 's32[2]{0}', space=sflag, size = 0x8, scoped, tag = 'scoped memory for tpu_custom_call.1']
    #allocation6 [shape = 'u8[1048576]{0}', space=vmem, size = 0x100000, scoped, tag = 'input window, operand 1, single buffered']
    #allocation7 [shape = 's32[1]{0}', space=sflag, size = 0x4, scoped, tag = 'scoped memory for tpu_custom_call.1']
    #allocation8 [shape = 'u8[262144]{0}', space=vmem, size = 0x40000, scoped, tag = 'input window, operand 3, single buffered']
    #allocation9 [shape = 'u8[65536]{0}', space=vmem, size = 0x10000, scoped, tag = 'input window, operand 5, single buffered']
    #allocation10 [shape = 's32[1]{0}', space=sflag, size = 0x4, scoped, tag = 'scoped memory for tpu_custom_call.1']
    #allocation11 [shape = 'u8[32768]{0}', space=vmem, size = 0x8000, scoped, tag = 'input window, operand 7, single buffered']
    #allocation12 [shape = 'u8[16384]{0}', space=vmem, size = 0x4000, scoped, tag = 'output window, operand 0']
    %14 = vsyncpa [#allocation4], 0
    %s15 = scalar_lea.sflag [#allocation4], 1
    %16 = vsyncpa %s15, 0
    %17 = vsyncpa [#allocation7], 0
    %18 = vsyncpa [#allocation10], 0
    %19 = vsyncpa [#allocation5], 0
    %s20 = scalar_lea.sflag [#allocation5], 1
    %21 = vsyncpa %s20, 0
    loop: start=0, step=1, limit=4
    $region2: #{tpu_custom_call.1} parent=1 // loop_pre_header
      _
    $region3: #{tpu_custom_call.1} parent=1 // loop_header
      %s23 = sphi 0, %s27
      %p24 = scmp.ge.s32.totalorder %s23, 4
      %s33 = sphi 0, %s35
      %s36 = sphi 0, %s33
      %s37 = sphi 0, %s36
      %s53 = sphi 0, %s37
      %s57 = sphi 0, %s57
      %s59 = sphi 0, %s57
      %s60 = sphi 0, %s59
      %s74 = sphi 0, %s60
      %s78 = sphi 0, %s78
      %s80 = sphi 0, %s78
      %s81 = sphi 0, %s80
      %s95 = sphi 0, %s81
      %s99 = sphi 0, %s99
      %s101 = sphi 0, %s99
      %s102 = sphi 0, %s101
      %s116 = sphi 0, %s102
      %s120 = sphi 0, %s120
      %s122 = sphi 0, %s120
      %s123 = sphi 0, %s122
      %s137 = sphi 0, %s123
      %s141 = sphi 0, %s141
      %s143 = sphi 0, %s141
      %s144 = sphi 0, %s143
      %s158 = sphi 0, %s144
      %s162 = sphi 0, %s162
      %s164 = sphi 0, %s162
      %s165 = sphi 0, %s164
      %s179 = sphi 0, %s165
      %s183 = sphi 0, %s183
      %s185 = sphi 0, %s183
      %s186 = sphi 0, %s185
      %s200 = sphi 0, %s186
      %s204 = sphi 0, %s204
      %s206 = sphi 0, %s204
      %s207 = sphi 0, %s206
      %s221 = sphi 0, %s207
      %s227 = sphi 0, %s229
      %s230 = sphi 0, %s227
      %s231 = sphi 0, %s230
      %s247 = sphi 0, %s231
    $region4: #{tpu_custom_call.1} parent=1 // loop_header_branch
      %26 = sbr.rel (%p24) target = $region8
    $region5: #{tpu_custom_call.1} parent=1 // loop_body
      %s28 = ssub.s32 %s23, 1
      %s29 = ssub.s32 %s23, 2
      %s30 = sadd.s32 %s23, 1
      %s31 = ssub.s32 %s23, %s30
      %p32 = scmp.eq.s32.totalorder %s31, 0
      %s34 = sadd.s32 %s33, 1
      %s35 = scalar_select %p32, %s33, %s34
      %p38 = pneg %p32
      %p39 = scmp.eq.s32.totalorder %s23, 1
      %p40 = por %p38, %p39
      %p41 = scmp.ne.s32.totalorder %s33, %s36
      %p42 = scmp.eq.s32.totalorder %s23, 0
      %p43 = por %p41, %p42
      %p44 = scmp.ne.s32.totalorder %s33, %s36
      %p45 = scmp.eq.s32.totalorder %s28, 1
      %p46 = por %p44, %p45
      %p47 = scmp.ne.s32.totalorder %s36, %s37
      %p48 = scmp.eq.s32.totalorder %s28, 0
      %p49 = por %p47, %p48
      %p50 = scmp.ne.s32.totalorder %s36, %s37
      %p51 = scmp.eq.s32.totalorder %s29, 1
      %p52 = por %p50, %p51
      %p54 = scmp.ne.s32.totalorder %s37, %s53
      %p55 = scmp.eq.s32.totalorder %s29, 0
      %p56 = por %p54, %p55
      %s58 = sadd.s32 %s57, 1
      %p61 = scmp.eq.s32.totalorder %s23, 1
      %p62 = scmp.ne.s32.totalorder %s57, %s59
      %p63 = scmp.eq.s32.totalorder %s23, 0
      %p64 = por %p62, %p63
      %p65 = scmp.ne.s32.totalorder %s57, %s59
      %p66 = scmp.eq.s32.totalorder %s28, 1
      %p67 = por %p65, %p66
      %p68 = scmp.ne.s32.totalorder %s59, %s60
      %p69 = scmp.eq.s32.totalorder %s28, 0
      %p70 = por %p68, %p69
      %p71 = scmp.ne.s32.totalorder %s59, %s60
      %p72 = scmp.eq.s32.totalorder %s29, 1
      %p73 = por %p71, %p72
      %p75 = scmp.ne.s32.totalorder %s60, %s74
      %p76 = scmp.eq.s32.totalorder %s29, 0
      %p77 = por %p75, %p76
      %s79 = sadd.s32 %s78, 1
      %p82 = scmp.eq.s32.totalorder %s23, 1
      %p83 = scmp.ne.s32.totalorder %s78, %s80
      %p84 = scmp.eq.s32.totalorder %s23, 0
      %p85 = por %p83, %p84
      %p86 = scmp.ne.s32.totalorder %s78, %s80
      %p87 = scmp.eq.s32.totalorder %s28, 1
      %p88 = por %p86, %p87
      %p89 = scmp.ne.s32.totalorder %s80, %s81
      %p90 = scmp.eq.s32.totalorder %s28, 0
      %p91 = por %p89, %p90
      %p92 = scmp.ne.s32.totalorder %s80, %s81
      %p93 = scmp.eq.s32.totalorder %s29, 1
      %p94 = por %p92, %p93
      %p96 = scmp.ne.s32.totalorder %s81, %s95
      %p97 = scmp.eq.s32.totalorder %s29, 0
      %p98 = por %p96, %p97
      %s100 = sadd.s32 %s99, 1
      %p103 = scmp.eq.s32.totalorder %s23, 1
      %p104 = scmp.ne.s32.totalorder %s99, %s101
      %p105 = scmp.eq.s32.totalorder %s23, 0
      %p106 = por %p104, %p105
      %p107 = scmp.ne.s32.totalorder %s99, %s101
      %p108 = scmp.eq.s32.totalorder %s28, 1
      %p109 = por %p107, %p108
      %p110 = scmp.ne.s32.totalorder %s101, %s102
      %p111 = scmp.eq.s32.totalorder %s28, 0
      %p112 = por %p110, %p111
      %p113 = scmp.ne.s32.totalorder %s101, %s102
      %p114 = scmp.eq.s32.totalorder %s29, 1
      %p115 = por %p113, %p114
      %p117 = scmp.ne.s32.totalorder %s102, %s116
      %p118 = scmp.eq.s32.totalorder %s29, 0
      %p119 = por %p117, %p118
      %s121 = sadd.s32 %s120, 1
      %p124 = scmp.eq.s32.totalorder %s23, 1
      %p125 = scmp.ne.s32.totalorder %s120, %s122
      %p126 = scmp.eq.s32.totalorder %s23, 0
      %p127 = por %p125, %p126
      %p128 = scmp.ne.s32.totalorder %s120, %s122
      %p129 = scmp.eq.s32.totalorder %s28, 1
      %p130 = por %p128, %p129
      %p131 = scmp.ne.s32.totalorder %s122, %s123
      %p132 = scmp.eq.s32.totalorder %s28, 0
      %p133 = por %p131, %p132
      %p134 = scmp.ne.s32.totalorder %s122, %s123
      %p135 = scmp.eq.s32.totalorder %s29, 1
      %p136 = por %p134, %p135
      %p138 = scmp.ne.s32.totalorder %s123, %s137
      %p139 = scmp.eq.s32.totalorder %s29, 0
      %p140 = por %p138, %p139
      %s142 = sadd.s32 %s141, 1
      %p145 = scmp.eq.s32.totalorder %s23, 1
      %p146 = scmp.ne.s32.totalorder %s141, %s143
      %p147 = scmp.eq.s32.totalorder %s23, 0
      %p148 = por %p146, %p147
      %p149 = scmp.ne.s32.totalorder %s141, %s143
      %p150 = scmp.eq.s32.totalorder %s28, 1
      %p151 = por %p149, %p150
      %p152 = scmp.ne.s32.totalorder %s143, %s144
      %p153 = scmp.eq.s32.totalorder %s28, 0
      %p154 = por %p152, %p153
      %p155 = scmp.ne.s32.totalorder %s143, %s144
      %p156 = scmp.eq.s32.totalorder %s29, 1
      %p157 = por %p155, %p156
      %p159 = scmp.ne.s32.totalorder %s144, %s158
      %p160 = scmp.eq.s32.totalorder %s29, 0
      %p161 = por %p159, %p160
      %s163 = sadd.s32 %s162, 1
      %p166 = scmp.eq.s32.totalorder %s23, 1
      %p167 = scmp.ne.s32.totalorder %s162, %s164
      %p168 = scmp.eq.s32.totalorder %s23, 0
      %p169 = por %p167, %p168
      %p170 = scmp.ne.s32.totalorder %s162, %s164
      %p171 = scmp.eq.s32.totalorder %s28, 1
      %p172 = por %p170, %p171
      %p173 = scmp.ne.s32.totalorder %s164, %s165
      %p174 = scmp.eq.s32.totalorder %s28, 0
      %p175 = por %p173, %p174
      %p176 = scmp.ne.s32.totalorder %s164, %s165
      %p177 = scmp.eq.s32.totalorder %s29, 1
      %p178 = por %p176, %p177
      %p180 = scmp.ne.s32.totalorder %s165, %s179
      %p181 = scmp.eq.s32.totalorder %s29, 0
      %p182 = por %p180, %p181
      %s184 = sadd.s32 %s183, 1
      %p187 = scmp.eq.s32.totalorder %s23, 1
      %p188 = scmp.ne.s32.totalorder %s183, %s185
      %p189 = scmp.eq.s32.totalorder %s23, 0
      %p190 = por %p188, %p189
      %p191 = scmp.ne.s32.totalorder %s183, %s185
      %p192 = scmp.eq.s32.totalorder %s28, 1
      %p193 = por %p191, %p192
      %p194 = scmp.ne.s32.totalorder %s185, %s186
      %p195 = scmp.eq.s32.totalorder %s28, 0
      %p196 = por %p194, %p195
      %p197 = scmp.ne.s32.totalorder %s185, %s186
      %p198 = scmp.eq.s32.totalorder %s29, 1
      %p199 = por %p197, %p198
      %p201 = scmp.ne.s32.totalorder %s186, %s200
      %p202 = scmp.eq.s32.totalorder %s29, 0
      %p203 = por %p201, %p202
      %s205 = sadd.s32 %s204, 1
      %p208 = scmp.eq.s32.totalorder %s23, 1
      %p209 = scmp.ne.s32.totalorder %s204, %s206
      %p210 = scmp.eq.s32.totalorder %s23, 0
      %p211 = por %p209, %p210
      %p212 = scmp.ne.s32.totalorder %s204, %s206
      %p213 = scmp.eq.s32.totalorder %s28, 1
      %p214 = por %p212, %p213
      %p215 = scmp.ne.s32.totalorder %s206, %s207
      %p216 = scmp.eq.s32.totalorder %s28, 0
      %p217 = por %p215, %p216
      %p218 = scmp.ne.s32.totalorder %s206, %s207
      %p219 = scmp.eq.s32.totalorder %s29, 1
      %p220 = por %p218, %p219
      %p222 = scmp.ne.s32.totalorder %s207, %s221
      %p223 = scmp.eq.s32.totalorder %s29, 0
      %p224 = por %p222, %p223
      %s225 = ssub.s32 %s23, %s30
      %p226 = scmp.eq.s32.totalorder %s225, 0
      %s228 = sadd.s32 %s227, 1
      %s229 = scalar_select %p226, %s227, %s228
      %p232 = pneg %p226
      %p233 = scmp.eq.s32.totalorder %s23, 1
      %p234 = por %p232, %p233
      %p235 = scmp.ne.s32.totalorder %s227, %s230
      %p236 = scmp.eq.s32.totalorder %s23, 0
      %p237 = por %p235, %p236
      %p238 = scmp.ne.s32.totalorder %s227, %s230
      %p239 = scmp.eq.s32.totalorder %s28, 1
      %p240 = por %p238, %p239
      %p241 = scmp.ne.s32.totalorder %s230, %s231
      %p242 = scmp.eq.s32.totalorder %s28, 0
      %p243 = por %p241, %p242
      %p244 = scmp.ne.s32.totalorder %s230, %s231
      %p245 = scmp.eq.s32.totalorder %s29, 1
      %p246 = por %p244, %p245
      %p248 = scmp.ne.s32.totalorder %s231, %s247
      %p249 = scmp.eq.s32.totalorder %s29, 0
      %p250 = por %p248, %p249
      %p251 = scmp.le.s32.totalorder 1, %s23
      %p252 = scmp.lt.s32.totalorder %s23, 3
      %p253 = pnand %p251, %p252
      %p254 = pneg %p253
      // Predicated region
      $region9: #{tpu_custom_call.1} parent=5 // pred_check
        _
      $region10: #{tpu_custom_call.1} parent=5 // pred_check_branch
        %256 = sbr.rel (%p253) target = $region12
      $region11: #{tpu_custom_call.1} parent=5 // pred_region
        %s257 = ssub.s32 %s23, 1
        // Predicated region
        $region13: #{tpu_custom_call.1} parent=11 // pred_check
          %p258 = pneg %p70
        $region14: #{tpu_custom_call.1} parent=11 // pred_check_branch
          %260 = sbr.rel (%p258) target = $region16
        $region15: #{tpu_custom_call.1} parent=11 // pred_region
          %s262 = ssub.s32 32768, 32768
          %263 = vsyncadd [#allocation7], %s262
          %s264 = sshll.u32 [#allocation6], 4
          %s265 = int_to_ptr.vmem [resolvable:$true] %s264
          %270 = dma.hbm_to_vmem [thread:$0]  %s1, 32768, %s265, [#allocation7], 256, 256, 16
        $region16: #{tpu_custom_call.1} parent=11 // pred_fallthru
          _
        // Predicated region
        $region17: #{tpu_custom_call.1} parent=11 // pred_check
          %p271 = pneg %p91
        $region18: #{tpu_custom_call.1} parent=11 // pred_check_branch
          %273 = sbr.rel (%p271) target = $region20
        $region19: #{tpu_custom_call.1} parent=11 // pred_region
          _
        $region20: #{tpu_custom_call.1} parent=11 // pred_fallthru
          _
        // Predicated region
        $region21: #{tpu_custom_call.1} parent=11 // pred_check
          %p274 = pneg %p112
        $region22: #{tpu_custom_call.1} parent=11 // pred_check_branch
          %276 = sbr.rel (%p274) target = $region24
        $region23: #{tpu_custom_call.1} parent=11 // pred_region
          %s278 = ssub.s32 8192, 8192
          %279 = vsyncadd [#allocation7], %s278
          %s280 = sshll.u32 [#allocation8], 4
          %s281 = int_to_ptr.vmem [resolvable:$true] %s280
          %286 = dma.hbm_to_vmem [thread:$0]  %s3, 8192, %s281, [#allocation7], 128, 128, 8
        $region24: #{tpu_custom_call.1} parent=11 // pred_fallthru
          _
        // Predicated region
        $region25: #{tpu_custom_call.1} parent=11 // pred_check
          %p287 = pneg %p133
        $region26: #{tpu_custom_call.1} parent=11 // pred_check_branch
          %289 = sbr.rel (%p287) target = $region28
        $region27: #{tpu_custom_call.1} parent=11 // pred_region
          _
        $region28: #{tpu_custom_call.1} parent=11 // pred_fallthru
          _
        // Predicated region
        $region29: #{tpu_custom_call.1} parent=11 // pred_check
          %p290 = pneg %p154
        $region30: #{tpu_custom_call.1} parent=11 // pred_check_branch
          %292 = sbr.rel (%p290) target = $region32
        $region31: #{tpu_custom_call.1} parent=11 // pred_region
          %s294 = ssub.s32 2048, 2048
          %295 = vsyncadd [#allocation10], %s294
          %s296 = sshll.u32 [#allocation9], 4
          %s297 = int_to_ptr.vmem [resolvable:$true] %s296
          %302 = dma.hbm_to_vmem [thread:$0]  %s5, 2048, %s297, [#allocation10], 64, 64, 4
        $region32: #{tpu_custom_call.1} parent=11 // pred_fallthru
          _
        // Predicated region
        $region33: #{tpu_custom_call.1} parent=11 // pred_check
          %p303 = pneg %p175
        $region34: #{tpu_custom_call.1} parent=11 // pred_check_branch
          %305 = sbr.rel (%p303) target = $region36
        $region35: #{tpu_custom_call.1} parent=11 // pred_region
          _
        $region36: #{tpu_custom_call.1} parent=11 // pred_fallthru
          _
        // Predicated region
        $region37: #{tpu_custom_call.1} parent=11 // pred_check
          %p306 = pneg %p196
        $region38: #{tpu_custom_call.1} parent=11 // pred_check_branch
          %308 = sbr.rel (%p306) target = $region40
        $region39: #{tpu_custom_call.1} parent=11 // pred_region
          %s310 = ssub.s32 1024, 1024
          %311 = vsyncadd [#allocation10], %s310
          %s312 = sshll.u32 [#allocation11], 4
          %s313 = int_to_ptr.vmem [resolvable:$true] %s312
          %318 = dma.hbm_to_vmem [thread:$0]  %s7, 1024, %s313, [#allocation10], 64, 64, 4
        $region40: #{tpu_custom_call.1} parent=11 // pred_fallthru
          _
        // Predicated region
        $region41: #{tpu_custom_call.1} parent=11 // pred_check
          %p319 = pneg %p217
        $region42: #{tpu_custom_call.1} parent=11 // pred_check_branch
          %321 = sbr.rel (%p319) target = $region44
        $region43: #{tpu_custom_call.1} parent=11 // pred_region
          _
        $region44: #{tpu_custom_call.1} parent=11 // pred_fallthru
          _
      $region12: #{tpu_custom_call.1} parent=5 // pred_fallthru
        _
      %p322 = scmp.lt.s32.totalorder %s23, 2
      // Predicated region
      $region45: #{tpu_custom_call.1} parent=5 // pred_check
        %p323 = pneg %p322
      $region46: #{tpu_custom_call.1} parent=5 // pred_check_branch
        %325 = sbr.rel (%p323) target = $region48
      $region47: #{tpu_custom_call.1} parent=5 // pred_region
        // Predicated region
        $region49: #{tpu_custom_call.1} parent=47 // pred_check
          %p326 = pneg %p43
        $region50: #{tpu_custom_call.1} parent=47 // pred_check_branch
          %328 = sbr.rel (%p326) target = $region52
        $region51: #{tpu_custom_call.1} parent=47 // pred_region
          %s329 = sand.u32 %s33, 1
          %s330 = scalar_lea.sflag [#allocation4], %s329
          %s331 = sand.u32 %s33, 1
          %s332 = smul.addr %s331, 128
          %s333 = scalar_lea.vmem [#allocation3], %s332
          %s334 = smul.u32 2, %s23
          %s335 = ssub.s32 3, %s334
          %p336 = scmp.lt.s32.totalorder %s335, 2
          %s337 = scalar_select %p336, %s335, 2
          %s338 = smul.u32 128, %s337
          %s339 = smul.u32 %s338, 8
          %s341 = ssub.s32 2048, %s339
          %342 = vsyncadd %s330, %s341
          %p343 = scmp.ne.s32.totalorder 0, %s339
          %s344 = smul.addr %s334, 8
          %s345 = smul.addr %s344, 128
          %s346 = scalar_lea.hbm %s0, %s345
          %s347 = smul.u32 64, %s337
          %s348 = sshll.u32 %s333, 4
          %s349 = int_to_ptr.vmem [resolvable:$true] %s348
          %s350 = sshll.u32 %s347, 4
          %354 = dma.hbm_to_vmem [thread:$0]  (%p343), %s346, %s350, %s349, %s330, 1024, 1024, 64
        $region52: #{tpu_custom_call.1} parent=47 // pred_fallthru
          _
      $region48: #{tpu_custom_call.1} parent=5 // pred_fallthru
        _
      %p355 = scmp.le.s32.totalorder 1, %s23
      %p356 = scmp.lt.s32.totalorder %s23, 3
      %p357 = pnand %p355, %p356
      %p358 = pneg %p357
      // Predicated region
      $region53: #{tpu_custom_call.1} parent=5 // pred_check
        _
      $region54: #{tpu_custom_call.1} parent=5 // pred_check_branch
        %360 = sbr.rel (%p357) target = $region56
      $region55: #{tpu_custom_call.1} parent=5 // pred_region
        %s361 = ssub.s32 %s23, 1
        %s362 = sand.u32 %s36, 1
        %s363 = scalar_lea.sflag [#allocation4], %s362
        %s364 = sand.u32 %s36, 1
        %s365 = smul.addr %s364, 128
        %s366 = scalar_lea.vmem [#allocation3], %s365
        // Predicated region
        $region57: #{tpu_custom_call.1} parent=55 // pred_check
          %p367 = pneg %p49
        $region58: #{tpu_custom_call.1} parent=55 // pred_check_branch
          %369 = sbr.rel (%p367) target = $region60
        $region59: #{tpu_custom_call.1} parent=55 // pred_region
          %370 = dma.done %s363, 2048
        $region60: #{tpu_custom_call.1} parent=55 // pred_fallthru
          _
        // Predicated region
        $region61: #{tpu_custom_call.1} parent=55 // pred_check
          %p371 = pneg %p70
        $region62: #{tpu_custom_call.1} parent=55 // pred_check_branch
          %373 = sbr.rel (%p371) target = $region64
        $region63: #{tpu_custom_call.1} parent=55 // pred_region
          %374 = dma.done [#allocation7], 32768
        $region64: #{tpu_custom_call.1} parent=55 // pred_fallthru
          _
        // Predicated region
        $region65: #{tpu_custom_call.1} parent=55 // pred_check
          %p375 = pneg %p112
        $region66: #{tpu_custom_call.1} parent=55 // pred_check_branch
          %377 = sbr.rel (%p375) target = $region68
        $region67: #{tpu_custom_call.1} parent=55 // pred_region
          %378 = dma.done [#allocation7], 8192
        $region68: #{tpu_custom_call.1} parent=55 // pred_fallthru
          _
        // Predicated region
        $region69: #{tpu_custom_call.1} parent=55 // pred_check
          %p379 = pneg %p154
        $region70: #{tpu_custom_call.1} parent=55 // pred_check_branch
          %381 = sbr.rel (%p379) target = $region72
        $region71: #{tpu_custom_call.1} parent=55 // pred_region
          %382 = dma.done [#allocation10], 2048
        $region72: #{tpu_custom_call.1} parent=55 // pred_fallthru
          _
        // Predicated region
        $region73: #{tpu_custom_call.1} parent=55 // pred_check
          %p383 = pneg %p196
        $region74: #{tpu_custom_call.1} parent=55 // pred_check_branch
          %385 = sbr.rel (%p383) target = $region76
        $region75: #{tpu_custom_call.1} parent=55 // pred_region
          %386 = dma.done [#allocation10], 1024
        $region76: #{tpu_custom_call.1} parent=55 // pred_fallthru
          _
        %s387 = sand.u32 %s36, 1
        %s388 = scalar_lea.sflag [#allocation4], %s387
        %s389 = sand.u32 %s36, 1
        %s390 = smul.addr %s389, 128
        %s391 = scalar_lea.vmem [#allocation3], %s390
        %p392 = pneg %p49
        %p393 = pneg %p46
        %p394 = pneg %p70
        %p395 = pneg %p67
        %p396 = pneg %p91
        %p397 = pneg %p88
        %p398 = pneg %p112
        %p399 = pneg %p109
        %p400 = pneg %p133
        %p401 = pneg %p130
        %p402 = pneg %p154
        %p403 = pneg %p151
        %p404 = pneg %p175
        %p405 = pneg %p172
        %p406 = pneg %p196
        %p407 = pneg %p193
        %p408 = pneg %p217
        %p409 = pneg %p214
        %p410 = pneg %p243
        %p411 = pneg %p240
        %s412 = sand.u32 %s230, 1
        %s413 = scalar_lea.sflag [#allocation5], %s412
        %s414 = sand.u32 %s230, 1
        %s415 = smul.addr %s414, 16
        %s416 = scalar_lea.vmem [#allocation12], %s415
        %s417 = smul.u32 2, %s28
        %s418 = ssub.s32 3, %s417
        %p419 = scmp.lt.s32.totalorder %s418, 2
        %s420 = scalar_select %p419, %s418, 2
        %s421 = smul.u32 128, %s420
        %s422 = smul.u32 %s421, 8
        %s423 = smul.u32 2, %s28
        %s424 = ssub.s32 3, %s423
        %p425 = scmp.lt.s32.totalorder %s424, 2
        %s426 = scalar_select %p425, %s424, 2
        %s427 = smul.u32 128, %s426
        %429 = vst [vmem:[#allocation2] sm:$0xff] 0
        %430 = vst [vmem:[#allocation2 + $0x8] sm:$0xff] 0
        %431 = vst [vmem:[#allocation2 + $0x10] sm:$0xff] 0
        %432 = vst [vmem:[#allocation2 + $0x18] sm:$0xff] 0
        %433 = vst [vmem:[#allocation2 + $0x20] sm:$0xff] 0
        %434 = vst [vmem:[#allocation2 + $0x28] sm:$0xff] 0
        %435 = vst [vmem:[#allocation2 + $0x30] sm:$0xff] 0
        %436 = vst [vmem:[#allocation2 + $0x38] sm:$0xff] 0
        %v437 = vld [vmem:[%s366] sm:$0xff]
        %v438 = vld [vmem:[%s366 + $0x8] sm:$0xff]
        %v439 = vld [vmem:[%s366 + $0x10] sm:$0xff]
        %v440 = vld [vmem:[%s366 + $0x18] sm:$0xff]
        %v441 = vld [vmem:[%s366 + $0x20] sm:$0xff]
        %v442 = vld [vmem:[%s366 + $0x28] sm:$0xff]
        %v443 = vld [vmem:[%s366 + $0x30] sm:$0xff]
        %v444 = vld [vmem:[%s366 + $0x38] sm:$0xff]
        %v445 = vld [vmem:[%s366 + $0x40] sm:$0xff]
        %v446 = vld [vmem:[%s366 + $0x48] sm:$0xff]
        %v447 = vld [vmem:[%s366 + $0x50] sm:$0xff]
        %v448 = vld [vmem:[%s366 + $0x58] sm:$0xff]
        %v449 = vld [vmem:[%s366 + $0x60] sm:$0xff]
        %v450 = vld [vmem:[%s366 + $0x68] sm:$0xff]
        %v451 = vld [vmem:[%s366 + $0x70] sm:$0xff]
        %v452 = vld [vmem:[%s366 + $0x78] sm:$0xff]
        %v453 = vpack.c.bf16 %v445, %v437
        %v454 = vpack.c.bf16 %v446, %v438
        %v455 = vpack.c.bf16 %v447, %v439
        %v456 = vpack.c.bf16 %v448, %v440
        %v457 = vpack.c.bf16 %v449, %v441
        %v458 = vpack.c.bf16 %v450, %v442
        %v459 = vpack.c.bf16 %v451, %v443
        %v460 = vpack.c.bf16 %v452, %v444
        %461 = vst [vmem:[#allocation2] sm:$0xff] %v453
        %462 = vst [vmem:[#allocation2 + $0x8] sm:$0xff] %v454
        %463 = vst [vmem:[#allocation2 + $0x10] sm:$0xff] %v455
        %464 = vst [vmem:[#allocation2 + $0x18] sm:$0xff] %v456
        %465 = vst [vmem:[#allocation2 + $0x20] sm:$0xff] %v457
        %466 = vst [vmem:[#allocation2 + $0x28] sm:$0xff] %v458
        %467 = vst [vmem:[#allocation2 + $0x30] sm:$0xff] %v459
        %vm468 = vcmask 596992
        %469 = vst.msk [vmem:[#allocation2 + $0x38] sm:$0xff] %vm468, %v460
        %v470 = vld [vmem:[#allocation2] sm:$0xff]
        %v471 = vld [vmem:[#allocation2 + $0x8] sm:$0xff]
        %v472 = vld [vmem:[#allocation2 + $0x10] sm:$0xff]
        %v473 = vld [vmem:[#allocation2 + $0x18] sm:$0xff]
        %v474 = vld [vmem:[#allocation2 + $0x20] sm:$0xff]
        %v475 = vld [vmem:[#allocation2 + $0x28] sm:$0xff]
        %v476 = vld [vmem:[#allocation2 + $0x30] sm:$0xff]
        %v477 = vld [vmem:[#allocation2 + $0x38] sm:$0xff]
        %v478 = vld [vmem:[#allocation6] sm:$0xff]
        %v479 = vld [vmem:[#allocation6 + $0x8] sm:$0xff]
        %v480 = vld [vmem:[#allocation6 + $0x10] sm:$0xff]
        %v481 = vld [vmem:[#allocation6 + $0x18] sm:$0xff]
        %v482 = vld [vmem:[#allocation6 + $0x20] sm:$0xff]
        %v483 = vld [vmem:[#allocation6 + $0x28] sm:$0xff]
        %v484 = vld [vmem:[#allocation6 + $0x30] sm:$0xff]
        %v485 = vld [vmem:[#allocation6 + $0x38] sm:$0xff]
        %v486 = vld [vmem:[#allocation6 + $0x40] sm:$0xff]
        %v487 = vld [vmem:[#allocation6 + $0x48] sm:$0xff]
        %v488 = vld [vmem:[#allocation6 + $0x50] sm:$0xff]
        %v489 = vld [vmem:[#allocation6 + $0x58] sm:$0xff]
        %v490 = vld [vmem:[#allocation6 + $0x60] sm:$0xff]
        %v491 = vld [vmem:[#allocation6 + $0x68] sm:$0xff]
        %v492 = vld [vmem:[#allocation6 + $0x70] sm:$0xff]
        %v493 = vld [vmem:[#allocation6 + $0x78] sm:$0xff]
        %v494 = vld [vmem:[#allocation6 + $0x80] sm:$0xff]
        %v495 = vld [vmem:[#allocation6 + $0x88] sm:$0xff]
        %v496 = vld [vmem:[#allocation6 + $0x90] sm:$0xff]
        %v497 = vld [vmem:[#allocation6 + $0x98] sm:$0xff]
        %v498 = vld [vmem:[#allocation6 + $0xa0] sm:$0xff]
        %v499 = vld [vmem:[#allocation6 + $0xa8] sm:$0xff]
        %v500 = vld [vmem:[#allocation6 + $0xb0] sm:$0xff]
        %v501 = vld [vmem:[#allocation6 + $0xb8] sm:$0xff]
        %v502 = vld [vmem:[#allocation6 + $0xc0] sm:$0xff]
        %v503 = vld [vmem:[#allocation6 + $0xc8] sm:$0xff]
        %v504 = vld [vmem:[#allocation6 + $0xd0] sm:$0xff]
        %v505 = vld [vmem:[#allocation6 + $0xd8] sm:$0xff]
        %v506 = vld [vmem:[#allocation6 + $0xe0] sm:$0xff]
        %v507 = vld [vmem:[#allocation6 + $0xe8] sm:$0xff]
        %v508 = vld [vmem:[#allocation6 + $0xf0] sm:$0xff]
        %v509 = vld [vmem:[#allocation6 + $0xf8] sm:$0xff]
        %v510 = vld [vmem:[#allocation6 + $0x100] sm:$0xff]
        %v511 = vld [vmem:[#allocation6 + $0x108] sm:$0xff]
        %v512 = vld [vmem:[#allocation6 + $0x110] sm:$0xff]
        %v513 = vld [vmem:[#allocation6 + $0x118] sm:$0xff]
        %v514 = vld [vmem:[#allocation6 + $0x120] sm:$0xff]
        %v515 = vld [vmem:[#allocation6 + $0x128] sm:$0xff]
        %v516 = vld [vmem:[#allocation6 + $0x130] sm:$0xff]
        %v517 = vld [vmem:[#allocation6 + $0x138] sm:$0xff]
        %v518 = vld [vmem:[#allocation6 + $0x140] sm:$0xff]
        %v519 = vld [vmem:[#allocation6 + $0x148] sm:$0xff]
        %v520 = vld [vmem:[#allocation6 + $0x150] sm:$0xff]
        %v521 = vld [vmem:[#allocation6 + $0x158] sm:$0xff]
        %v522 = vld [vmem:[#allocation6 + $0x160] sm:$0xff]
        %v523 = vld [vmem:[#allocation6 + $0x168] sm:$0xff]
        %v524 = vld [vmem:[#allocation6 + $0x170] sm:$0xff]
        %v525 = vld [vmem:[#allocation6 + $0x178] sm:$0xff]
        %v526 = vld [vmem:[#allocation6 + $0x180] sm:$0xff]
        %v527 = vld [vmem:[#allocation6 + $0x188] sm:$0xff]
        %v528 = vld [vmem:[#allocation6 + $0x190] sm:$0xff]
        %v529 = vld [vmem:[#allocation6 + $0x198] sm:$0xff]
        %v530 = vld [vmem:[#allocation6 + $0x1a0] sm:$0xff]
        %v531 = vld [vmem:[#allocation6 + $0x1a8] sm:$0xff]
        %v532 = vld [vmem:[#allocation6 + $0x1b0] sm:$0xff]
        %v533 = vld [vmem:[#allocation6 + $0x1b8] sm:$0xff]
        %v534 = vld [vmem:[#allocation6 + $0x1c0] sm:$0xff]
        %v535 = vld [vmem:[#allocation6 + $0x1c8] sm:$0xff]
        %v536 = vld [vmem:[#allocation6 + $0x1d0] sm:$0xff]
        %v537 = vld [vmem:[#allocation6 + $0x1d8] sm:$0xff]
        %v538 = vld [vmem:[#allocation6 + $0x1e0] sm:$0xff]
        %v539 = vld [vmem:[#allocation6 + $0x1e8] sm:$0xff]
        %v540 = vld [vmem:[#allocation6 + $0x1f0] sm:$0xff]
        %v541 = vld [vmem:[#allocation6 + $0x1f8] sm:$0xff]
        %v542 = vld [vmem:[#allocation6 + $0x200] sm:$0xff]
        %v543 = vld [vmem:[#allocation6 + $0x208] sm:$0xff]
        %v544 = vld [vmem:[#allocation6 + $0x210] sm:$0xff]
        %v545 = vld [vmem:[#allocation6 + $0x218] sm:$0xff]
        %v546 = vld [vmem:[#allocation6 + $0x220] sm:$0xff]
        %v547 = vld [vmem:[#allocation6 + $0x228] sm:$0xff]
        %v548 = vld [vmem:[#allocation6 + $0x230] sm:$0xff]
        %v549 = vld [vmem:[#allocation6 + $0x238] sm:$0xff]
        %v550 = vld [vmem:[#allocation6 + $0x240] sm:$0xff]
        %v551 = vld [vmem:[#allocation6 + $0x248] sm:$0xff]
        %v552 = vld [vmem:[#allocation6 + $0x250] sm:$0xff]
        %v553 = vld [vmem:[#allocation6 + $0x258] sm:$0xff]
        %v554 = vld [vmem:[#allocation6 + $0x260] sm:$0xff]
        %v555 = vld [vmem:[#allocation6 + $0x268] sm:$0xff]
        %v556 = vld [vmem:[#allocation6 + $0x270] sm:$0xff]
        %v557 = vld [vmem:[#allocation6 + $0x278] sm:$0xff]
        %v558 = vld [vmem:[#allocation6 + $0x280] sm:$0xff]
        %v559 = vld [vmem:[#allocation6 + $0x288] sm:$0xff]
        %v560 = vld [vmem:[#allocation6 + $0x290] sm:$0xff]
        %v561 = vld [vmem:[#allocation6 + $0x298] sm:$0xff]
        %v562 = vld [vmem:[#allocation6 + $0x2a0] sm:$0xff]
        %v563 = vld [vmem:[#allocation6 + $0x2a8] sm:$0xff]
        %v564 = vld [vmem:[#allocation6 + $0x2b0] sm:$0xff]
        %v565 = vld [vmem:[#allocation6 + $0x2b8] sm:$0xff]
        %v566 = vld [vmem:[#allocation6 + $0x2c0] sm:$0xff]
        %v567 = vld [vmem:[#allocation6 + $0x2c8] sm:$0xff]
        %v568 = vld [vmem:[#allocation6 + $0x2d0] sm:$0xff]
        %v569 = vld [vmem:[#allocation6 + $0x2d8] sm:$0xff]
        %v570 = vld [vmem:[#allocation6 + $0x2e0] sm:$0xff]
        %v571 = vld [vmem:[#allocation6 + $0x2e8] sm:$0xff]
        %v572 = vld [vmem:[#allocation6 + $0x2f0] sm:$0xff]
        %v573 = vld [vmem:[#allocation6 + $0x2f8] sm:$0xff]
        %v574 = vld [vmem:[#allocation6 + $0x300] sm:$0xff]
        %v575 = vld [vmem:[#allocation6 + $0x308] sm:$0xff]
        %v576 = vld [vmem:[#allocation6 + $0x310] sm:$0xff]
        %v577 = vld [vmem:[#allocation6 + $0x318] sm:$0xff]
        %v578 = vld [vmem:[#allocation6 + $0x320] sm:$0xff]
        %v579 = vld [vmem:[#allocation6 + $0x328] sm:$0xff]
        %v580 = vld [vmem:[#allocation6 + $0x330] sm:$0xff]
        %v581 = vld [vmem:[#allocation6 + $0x338] sm:$0xff]
        %v582 = vld [vmem:[#allocation6 + $0x340] sm:$0xff]
        %v583 = vld [vmem:[#allocation6 + $0x348] sm:$0xff]
        %v584 = vld [vmem:[#allocation6 + $0x350] sm:$0xff]
        %v585 = vld [vmem:[#allocation6 + $0x358] sm:$0xff]
        %v586 = vld [vmem:[#allocation6 + $0x360] sm:$0xff]
        %v587 = vld [vmem:[#allocation6 + $0x368] sm:$0xff]
        %v588 = vld [vmem:[#allocation6 + $0x370] sm:$0xff]
        %v589 = vld [vmem:[#allocation6 + $0x378] sm:$0xff]
        %v590 = vld [vmem:[#allocation6 + $0x380] sm:$0xff]
        %v591 = vld [vmem:[#allocation6 + $0x388] sm:$0xff]
        %v592 = vld [vmem:[#allocation6 + $0x390] sm:$0xff]
        %v593 = vld [vmem:[#allocation6 + $0x398] sm:$0xff]
        %v594 = vld [vmem:[#allocation6 + $0x3a0] sm:$0xff]
        %v595 = vld [vmem:[#allocation6 + $0x3a8] sm:$0xff]
        %v596 = vld [vmem:[#allocation6 + $0x3b0] sm:$0xff]
        %v597 = vld [vmem:[#allocation6 + $0x3b8] sm:$0xff]
        %v598 = vld [vmem:[#allocation6 + $0x3c0] sm:$0xff]
        %v599 = vld [vmem:[#allocation6 + $0x3c8] sm:$0xff]
        %v600 = vld [vmem:[#allocation6 + $0x3d0] sm:$0xff]
        %v601 = vld [vmem:[#allocation6 + $0x3d8] sm:$0xff]
        %v602 = vld [vmem:[#allocation6 + $0x3e0] sm:$0xff]
        %v603 = vld [vmem:[#allocation6 + $0x3e8] sm:$0xff]
        %v604 = vld [vmem:[#allocation6 + $0x3f0] sm:$0xff]
        %v605 = vld [vmem:[#allocation6 + $0x3f8] sm:$0xff]
        %v606 = vld [vmem:[#allocation6 + $0x400] sm:$0xff]
        %v607 = vld [vmem:[#allocation6 + $0x408] sm:$0xff]
        %v608 = vld [vmem:[#allocation6 + $0x410] sm:$0xff]
        %v609 = vld [vmem:[#allocation6 + $0x418] sm:$0xff]
        %v610 = vld [vmem:[#allocation6 + $0x420] sm:$0xff]
        %v611 = vld [vmem:[#allocation6 + $0x428] sm:$0xff]
        %v612 = vld [vmem:[#allocation6 + $0x430] sm:$0xff]
        %v613 = vld [vmem:[#allocation6 + $0x438] sm:$0xff]
        %v614 = vld [vmem:[#allocation6 + $0x440] sm:$0xff]
        %v615 = vld [vmem:[#allocation6 + $0x448] sm:$0xff]
        %v616 = vld [vmem:[#allocation6 + $0x450] sm:$0xff]
        %v617 = vld [vmem:[#allocation6 + $0x458] sm:$0xff]
        %v618 = vld [vmem:[#allocation6 + $0x460] sm:$0xff]
        %v619 = vld [vmem:[#allocation6 + $0x468] sm:$0xff]
        %v620 = vld [vmem:[#allocation6 + $0x470] sm:$0xff]
        %v621 = vld [vmem:[#allocation6 + $0x478] sm:$0xff]
        %v622 = vld [vmem:[#allocation6 + $0x480] sm:$0xff]
        %v623 = vld [vmem:[#allocation6 + $0x488] sm:$0xff]
        %v624 = vld [vmem:[#allocation6 + $0x490] sm:$0xff]
        %v625 = vld [vmem:[#allocation6 + $0x498] sm:$0xff]
        %v626 = vld [vmem:[#allocation6 + $0x4a0] sm:$0xff]
        %v627 = vld [vmem:[#allocation6 + $0x4a8] sm:$0xff]
        %v628 = vld [vmem:[#allocation6 + $0x4b0] sm:$0xff]
        %v629 = vld [vmem:[#allocation6 + $0x4b8] sm:$0xff]
        %v630 = vld [vmem:[#allocation6 + $0x4c0] sm:$0xff]
        %v631 = vld [vmem:[#allocation6 + $0x4c8] sm:$0xff]
        %v632 = vld [vmem:[#allocation6 + $0x4d0] sm:$0xff]
        %v633 = vld [vmem:[#allocation6 + $0x4d8] sm:$0xff]
        %v634 = vld [vmem:[#allocation6 + $0x4e0] sm:$0xff]
        %v635 = vld [vmem:[#allocation6 + $0x4e8] sm:$0xff]
        %v636 = vld [vmem:[#allocation6 + $0x4f0] sm:$0xff]
        %v637 = vld [vmem:[#allocation6 + $0x4f8] sm:$0xff]
        %v638 = vld [vmem:[#allocation6 + $0x500] sm:$0xff]
        %v639 = vld [vmem:[#allocation6 + $0x508] sm:$0xff]
        %v640 = vld [vmem:[#allocation6 + $0x510] sm:$0xff]
        %v641 = vld [vmem:[#allocation6 + $0x518] sm:$0xff]
        %v642 = vld [vmem:[#allocation6 + $0x520] sm:$0xff]
        %v643 = vld [vmem:[#allocation6 + $0x528] sm:$0xff]
        %v644 = vld [vmem:[#allocation6 + $0x530] sm:$0xff]
        %v645 = vld [vmem:[#allocation6 + $0x538] sm:$0xff]
        %v646 = vld [vmem:[#allocation6 + $0x540] sm:$0xff]
        %v647 = vld [vmem:[#allocation6 + $0x548] sm:$0xff]
        %v648 = vld [vmem:[#allocation6 + $0x550] sm:$0xff]
        %v649 = vld [vmem:[#allocation6 + $0x558] sm:$0xff]
        %v650 = vld [vmem:[#allocation6 + $0x560] sm:$0xff]
        %v651 = vld [vmem:[#allocation6 + $0x568] sm:$0xff]
        %v652 = vld [vmem:[#allocation6 + $0x570] sm:$0xff]
        %v653 = vld [vmem:[#allocation6 + $0x578] sm:$0xff]
        %v654 = vld [vmem:[#allocation6 + $0x580] sm:$0xff]
        %v655 = vld [vmem:[#allocation6 + $0x588] sm:$0xff]
        %v656 = vld [vmem:[#allocation6 + $0x590] sm:$0xff]
        %v657 = vld [vmem:[#allocation6 + $0x598] sm:$0xff]
        %v658 = vld [vmem:[#allocation6 + $0x5a0] sm:$0xff]
        %v659 = vld [vmem:[#allocation6 + $0x5a8] sm:$0xff]
        %v660 = vld [vmem:[#allocation6 + $0x5b0] sm:$0xff]
        %v661 = vld [vmem:[#allocation6 + $0x5b8] sm:$0xff]
        %v662 = vld [vmem:[#allocation6 + $0x5c0] sm:$0xff]
        %v663 = vld [vmem:[#allocation6 + $0x5c8] sm:$0xff]
        %v664 = vld [vmem:[#allocation6 + $0x5d0] sm:$0xff]
        %v665 = vld [vmem:[#allocation6 + $0x5d8] sm:$0xff]
        %v666 = vld [vmem:[#allocation6 + $0x5e0] sm:$0xff]
        %v667 = vld [vmem:[#allocation6 + $0x5e8] sm:$0xff]
        %v668 = vld [vmem:[#allocation6 + $0x5f0] sm:$0xff]
        %v669 = vld [vmem:[#allocation6 + $0x5f8] sm:$0xff]
        %v670 = vld [vmem:[#allocation6 + $0x600] sm:$0xff]
        %v671 = vld [vmem:[#allocation6 + $0x608] sm:$0xff]
        %v672 = vld [vmem:[#allocation6 + $0x610] sm:$0xff]
        %v673 = vld [vmem:[#allocation6 + $0x618] sm:$0xff]
        %v674 = vld [vmem:[#allocation6 + $0x620] sm:$0xff]
        %v675 = vld [vmem:[#allocation6 + $0x628] sm:$0xff]
        %v676 = vld [vmem:[#allocation6 + $0x630] sm:$0xff]
        %v677 = vld [vmem:[#allocation6 + $0x638] sm:$0xff]
        %v678 = vld [vmem:[#allocation6 + $0x640] sm:$0xff]
        %v679 = vld [vmem:[#allocation6 + $0x648] sm:$0xff]
        %v680 = vld [vmem:[#allocation6 + $0x650] sm:$0xff]
        %v681 = vld [vmem:[#allocation6 + $0x658] sm:$0xff]
        %v682 = vld [vmem:[#allocation6 + $0x660] sm:$0xff]
        %v683 = vld [vmem:[#allocation6 + $0x668] sm:$0xff]
        %v684 = vld [vmem:[#allocation6 + $0x670] sm:$0xff]
        %v685 = vld [vmem:[#allocation6 + $0x678] sm:$0xff]
        %v686 = vld [vmem:[#allocation6 + $0x680] sm:$0xff]
        %v687 = vld [vmem:[#allocation6 + $0x688] sm:$0xff]
        %v688 = vld [vmem:[#allocation6 + $0x690] sm:$0xff]
        %v689 = vld [vmem:[#allocation6 + $0x698] sm:$0xff]
        %v690 = vld [vmem:[#allocation6 + $0x6a0] sm:$0xff]
        %v691 = vld [vmem:[#allocation6 + $0x6a8] sm:$0xff]
        %v692 = vld [vmem:[#allocation6 + $0x6b0] sm:$0xff]
        %v693 = vld [vmem:[#allocation6 + $0x6b8] sm:$0xff]
        %v694 = vld [vmem:[#allocation6 + $0x6c0] sm:$0xff]
        %v695 = vld [vmem:[#allocation6 + $0x6c8] sm:$0xff]
        %v696 = vld [vmem:[#allocation6 + $0x6d0] sm:$0xff]
        %v697 = vld [vmem:[#allocation6 + $0x6d8] sm:$0xff]
        %v698 = vld [vmem:[#allocation6 + $0x6e0] sm:$0xff]
        %v699 = vld [vmem:[#allocation6 + $0x6e8] sm:$0xff]
        %v700 = vld [vmem:[#allocation6 + $0x6f0] sm:$0xff]
        %v701 = vld [vmem:[#allocation6 + $0x6f8] sm:$0xff]
        %v702 = vld [vmem:[#allocation6 + $0x700] sm:$0xff]
        %v703 = vld [vmem:[#allocation6 + $0x708] sm:$0xff]
        %v704 = vld [vmem:[#allocation6 + $0x710] sm:$0xff]
        %v705 = vld [vmem:[#allocation6 + $0x718] sm:$0xff]
        %v706 = vld [vmem:[#allocation6 + $0x720] sm:$0xff]
        %v707 = vld [vmem:[#allocation6 + $0x728] sm:$0xff]
        %v708 = vld [vmem:[#allocation6 + $0x730] sm:$0xff]
        %v709 = vld [vmem:[#allocation6 + $0x738] sm:$0xff]
        %v710 = vld [vmem:[#allocation6 + $0x740] sm:$0xff]
        %v711 = vld [vmem:[#allocation6 + $0x748] sm:$0xff]
        %v712 = vld [vmem:[#allocation6 + $0x750] sm:$0xff]
        %v713 = vld [vmem:[#allocation6 + $0x758] sm:$0xff]
        %v714 = vld [vmem:[#allocation6 + $0x760] sm:$0xff]
        %v715 = vld [vmem:[#allocation6 + $0x768] sm:$0xff]
        %v716 = vld [vmem:[#allocation6 + $0x770] sm:$0xff]
        %v717 = vld [vmem:[#allocation6 + $0x778] sm:$0xff]
        %v718 = vld [vmem:[#allocation6 + $0x780] sm:$0xff]
        %v719 = vld [vmem:[#allocation6 + $0x788] sm:$0xff]
        %v720 = vld [vmem:[#allocation6 + $0x790] sm:$0xff]
        %v721 = vld [vmem:[#allocation6 + $0x798] sm:$0xff]
        %v722 = vld [vmem:[#allocation6 + $0x7a0] sm:$0xff]
        %v723 = vld [vmem:[#allocation6 + $0x7a8] sm:$0xff]
        %v724 = vld [vmem:[#allocation6 + $0x7b0] sm:$0xff]
        %v725 = vld [vmem:[#allocation6 + $0x7b8] sm:$0xff]
        %v726 = vld [vmem:[#allocation6 + $0x7c0] sm:$0xff]
        %v727 = vld [vmem:[#allocation6 + $0x7c8] sm:$0xff]
        %v728 = vld [vmem:[#allocation6 + $0x7d0] sm:$0xff]
        %v729 = vld [vmem:[#allocation6 + $0x7d8] sm:$0xff]
        %v730 = vld [vmem:[#allocation6 + $0x7e0] sm:$0xff]
        %v731 = vld [vmem:[#allocation6 + $0x7e8] sm:$0xff]
        %v732 = vld [vmem:[#allocation6 + $0x7f0] sm:$0xff]
        %v733 = vld [vmem:[#allocation6 + $0x7f8] sm:$0xff]
        %v734 = vld [vmem:[%s2] sm:$0xf]
        %v736 = vlaneseq
        %v737 = vshrl.u32 %v736, 7
        %v738 = vsub.s32 0, %v737
        %v739 = vrot.slane %v734, %v738
        %v740 = vlaneseq
        %v741 = vshrl.u32 %v740, 7
        %v742 = vsub.s32 1, %v741
        %v743 = vrot.slane %v734, %v742
        %v744 = vlaneseq
        %v745 = vshrl.u32 %v744, 7
        %v746 = vsub.s32 2, %v745
        %v747 = vrot.slane %v734, %v746
        %v748 = vlaneseq
        %v749 = vshrl.u32 %v748, 7
        %v750 = vsub.s32 3, %v749
        %v751 = vrot.slane %v734, %v750
        %v1012 = vunpack.c.l.b16 %v478
        %v1013 = vunpack.c.h.b16 %v478
        %v1014 = vunpack.c.l.b16 %v479
        %v1015 = vunpack.c.h.b16 %v479
        %v1016 = vunpack.c.l.b16 %v480
        %v1017 = vunpack.c.h.b16 %v480
        %v1018 = vunpack.c.l.b16 %v481
        %v1019 = vunpack.c.h.b16 %v481
        %v1020 = vunpack.c.l.b16 %v482
        %v1021 = vunpack.c.h.b16 %v482
        %v1022 = vunpack.c.l.b16 %v483
        %v1023 = vunpack.c.h.b16 %v483
        %v1024 = vunpack.c.l.b16 %v484
        %v1025 = vunpack.c.h.b16 %v484
        %v1026 = vunpack.c.l.b16 %v485
        %v1027 = vunpack.c.h.b16 %v485
        %v1028 = vunpack.c.l.b16 %v486
        %v1029 = vunpack.c.h.b16 %v486
        %v1030 = vunpack.c.l.b16 %v487
        %v1031 = vunpack.c.h.b16 %v487
        %v1032 = vunpack.c.l.b16 %v488
        %v1033 = vunpack.c.h.b16 %v488
        %v1034 = vunpack.c.l.b16 %v489
        %v1035 = vunpack.c.h.b16 %v489
        %v1036 = vunpack.c.l.b16 %v490
        %v1037 = vunpack.c.h.b16 %v490
        %v1038 = vunpack.c.l.b16 %v491
        %v1039 = vunpack.c.h.b16 %v491
        %v1040 = vunpack.c.l.b16 %v492
        %v1041 = vunpack.c.h.b16 %v492
        %v1042 = vunpack.c.l.b16 %v493
        %v1043 = vunpack.c.h.b16 %v493
        %v1044 = vunpack.c.l.b16 %v494
        %v1045 = vunpack.c.h.b16 %v494
        %v1046 = vunpack.c.l.b16 %v495
        %v1047 = vunpack.c.h.b16 %v495
        %v1048 = vunpack.c.l.b16 %v496
        %v1049 = vunpack.c.h.b16 %v496
        %v1050 = vunpack.c.l.b16 %v497
        %v1051 = vunpack.c.h.b16 %v497
        %v1052 = vunpack.c.l.b16 %v498
        %v1053 = vunpack.c.h.b16 %v498
        %v1054 = vunpack.c.l.b16 %v499
        %v1055 = vunpack.c.h.b16 %v499
        %v1056 = vunpack.c.l.b16 %v500
        %v1057 = vunpack.c.h.b16 %v500
        %v1058 = vunpack.c.l.b16 %v501
        %v1059 = vunpack.c.h.b16 %v501
        %v1060 = vunpack.c.l.b16 %v502
        %v1061 = vunpack.c.h.b16 %v502
        %v1062 = vunpack.c.l.b16 %v503
        %v1063 = vunpack.c.h.b16 %v503
        %v1064 = vunpack.c.l.b16 %v504
        %v1065 = vunpack.c.h.b16 %v504
        %v1066 = vunpack.c.l.b16 %v505
        %v1067 = vunpack.c.h.b16 %v505
        %v1068 = vunpack.c.l.b16 %v506
        %v1069 = vunpack.c.h.b16 %v506
        %v1070 = vunpack.c.l.b16 %v507
        %v1071 = vunpack.c.h.b16 %v507
        %v1072 = vunpack.c.l.b16 %v508
        %v1073 = vunpack.c.h.b16 %v508
        %v1074 = vunpack.c.l.b16 %v509
        %v1075 = vunpack.c.h.b16 %v509
        %v1076 = vunpack.c.l.b16 %v510
        %v1077 = vunpack.c.h.b16 %v510
        %v1078 = vunpack.c.l.b16 %v511
        %v1079 = vunpack.c.h.b16 %v511
        %v1080 = vunpack.c.l.b16 %v512
        %v1081 = vunpack.c.h.b16 %v512
        %v1082 = vunpack.c.l.b16 %v513
        %v1083 = vunpack.c.h.b16 %v513
        %v1084 = vunpack.c.l.b16 %v514
        %v1085 = vunpack.c.h.b16 %v514
        %v1086 = vunpack.c.l.b16 %v515
        %v1087 = vunpack.c.h.b16 %v515
        %v1088 = vunpack.c.l.b16 %v516
        %v1089 = vunpack.c.h.b16 %v516
        %v1090 = vunpack.c.l.b16 %v517
        %v1091 = vunpack.c.h.b16 %v517
        %v1092 = vunpack.c.l.b16 %v518
        %v1093 = vunpack.c.h.b16 %v518
        %v1094 = vunpack.c.l.b16 %v519
        %v1095 = vunpack.c.h.b16 %v519
        %v1096 = vunpack.c.l.b16 %v520
        %v1097 = vunpack.c.h.b16 %v520
        %v1098 = vunpack.c.l.b16 %v521
        %v1099 = vunpack.c.h.b16 %v521
        %v1100 = vunpack.c.l.b16 %v522
        %v1101 = vunpack.c.h.b16 %v522
        %v1102 = vunpack.c.l.b16 %v523
        %v1103 = vunpack.c.h.b16 %v523
        %v1104 = vunpack.c.l.b16 %v524
        %v1105 = vunpack.c.h.b16 %v524
        %v1106 = vunpack.c.l.b16 %v525
        %v1107 = vunpack.c.h.b16 %v525
        %v1108 = vunpack.c.l.b16 %v526
        %v1109 = vunpack.c.h.b16 %v526
        %v1110 = vunpack.c.l.b16 %v527
        %v1111 = vunpack.c.h.b16 %v527
        %v1112 = vunpack.c.l.b16 %v528
        %v1113 = vunpack.c.h.b16 %v528
        %v1114 = vunpack.c.l.b16 %v529
        %v1115 = vunpack.c.h.b16 %v529
        %v1116 = vunpack.c.l.b16 %v530
        %v1117 = vunpack.c.h.b16 %v530
        %v1118 = vunpack.c.l.b16 %v531
        %v1119 = vunpack.c.h.b16 %v531
        %v1120 = vunpack.c.l.b16 %v532
        %v1121 = vunpack.c.h.b16 %v532
        %v1122 = vunpack.c.l.b16 %v533
        %v1123 = vunpack.c.h.b16 %v533
        %v1124 = vunpack.c.l.b16 %v534
        %v1125 = vunpack.c.h.b16 %v534
        %v1126 = vunpack.c.l.b16 %v535
        %v1127 = vunpack.c.h.b16 %v535
        %v1128 = vunpack.c.l.b16 %v536
        %v1129 = vunpack.c.h.b16 %v536
        %v1130 = vunpack.c.l.b16 %v537
        %v1131 = vunpack.c.h.b16 %v537
        %v1132 = vunpack.c.l.b16 %v538
        %v1133 = vunpack.c.h.b16 %v538
        %v1134 = vunpack.c.l.b16 %v539
        %v1135 = vunpack.c.h.b16 %v539
        %v1136 = vunpack.c.l.b16 %v540
        %v1137 = vunpack.c.h.b16 %v540
        %v1138 = vunpack.c.l.b16 %v541
        %v1139 = vunpack.c.h.b16 %v541
        %v1140 = vunpack.c.l.b16 %v542
        %v1141 = vunpack.c.h.b16 %v542
        %v1142 = vunpack.c.l.b16 %v543
        %v1143 = vunpack.c.h.b16 %v543
        %v1144 = vunpack.c.l.b16 %v544
        %v1145 = vunpack.c.h.b16 %v544
        %v1146 = vunpack.c.l.b16 %v545
        %v1147 = vunpack.c.h.b16 %v545
        %v1148 = vunpack.c.l.b16 %v546
        %v1149 = vunpack.c.h.b16 %v546
        %v1150 = vunpack.c.l.b16 %v547
        %v1151 = vunpack.c.h.b16 %v547
        %v1152 = vunpack.c.l.b16 %v548
        %v1153 = vunpack.c.h.b16 %v548
        %v1154 = vunpack.c.l.b16 %v549
        %v1155 = vunpack.c.h.b16 %v549
        %v1156 = vunpack.c.l.b16 %v550
        %v1157 = vunpack.c.h.b16 %v550
        %v1158 = vunpack.c.l.b16 %v551
        %v1159 = vunpack.c.h.b16 %v551
        %v1160 = vunpack.c.l.b16 %v552
        %v1161 = vunpack.c.h.b16 %v552
        %v1162 = vunpack.c.l.b16 %v553
        %v1163 = vunpack.c.h.b16 %v553
        %v1164 = vunpack.c.l.b16 %v554
        %v1165 = vunpack.c.h.b16 %v554
        %v1166 = vunpack.c.l.b16 %v555
        %v1167 = vunpack.c.h.b16 %v555
        %v1168 = vunpack.c.l.b16 %v556
        %v1169 = vunpack.c.h.b16 %v556
        %v1170 = vunpack.c.l.b16 %v557
        %v1171 = vunpack.c.h.b16 %v557
        %v1172 = vunpack.c.l.b16 %v558
        %v1173 = vunpack.c.h.b16 %v558
        %v1174 = vunpack.c.l.b16 %v559
        %v1175 = vunpack.c.h.b16 %v559
        %v1176 = vunpack.c.l.b16 %v560
        %v1177 = vunpack.c.h.b16 %v560
        %v1178 = vunpack.c.l.b16 %v561
        %v1179 = vunpack.c.h.b16 %v561
        %v1180 = vunpack.c.l.b16 %v562
        %v1181 = vunpack.c.h.b16 %v562
        %v1182 = vunpack.c.l.b16 %v563
        %v1183 = vunpack.c.h.b16 %v563
        %v1184 = vunpack.c.l.b16 %v564
        %v1185 = vunpack.c.h.b16 %v564
        %v1186 = vunpack.c.l.b16 %v565
        %v1187 = vunpack.c.h.b16 %v565
        %v1188 = vunpack.c.l.b16 %v566
        %v1189 = vunpack.c.h.b16 %v566
        %v1190 = vunpack.c.l.b16 %v567
        %v1191 = vunpack.c.h.b16 %v567
        %v1192 = vunpack.c.l.b16 %v568
        %v1193 = vunpack.c.h.b16 %v568
        %v1194 = vunpack.c.l.b16 %v569
        %v1195 = vunpack.c.h.b16 %v569
        %v1196 = vunpack.c.l.b16 %v570
        %v1197 = vunpack.c.h.b16 %v570
        %v1198 = vunpack.c.l.b16 %v571
        %v1199 = vunpack.c.h.b16 %v571
        %v1200 = vunpack.c.l.b16 %v572
        %v1201 = vunpack.c.h.b16 %v572
        %v1202 = vunpack.c.l.b16 %v573
        %v1203 = vunpack.c.h.b16 %v573
        %v1204 = vunpack.c.l.b16 %v574
        %v1205 = vunpack.c.h.b16 %v574
        %v1206 = vunpack.c.l.b16 %v575
        %v1207 = vunpack.c.h.b16 %v575
        %v1208 = vunpack.c.l.b16 %v576
        %v1209 = vunpack.c.h.b16 %v576
        %v1210 = vunpack.c.l.b16 %v577
        %v1211 = vunpack.c.h.b16 %v577
        %v1212 = vunpack.c.l.b16 %v578
        %v1213 = vunpack.c.h.b16 %v578
        %v1214 = vunpack.c.l.b16 %v579
        %v1215 = vunpack.c.h.b16 %v579
        %v1216 = vunpack.c.l.b16 %v580
        %v1217 = vunpack.c.h.b16 %v580
        %v1218 = vunpack.c.l.b16 %v581
        %v1219 = vunpack.c.h.b16 %v581
        %v1220 = vunpack.c.l.b16 %v582
        %v1221 = vunpack.c.h.b16 %v582
        %v1222 = vunpack.c.l.b16 %v583
        %v1223 = vunpack.c.h.b16 %v583
        %v1224 = vunpack.c.l.b16 %v584
        %v1225 = vunpack.c.h.b16 %v584
        %v1226 = vunpack.c.l.b16 %v585
        %v1227 = vunpack.c.h.b16 %v585
        %v1228 = vunpack.c.l.b16 %v586
        %v1229 = vunpack.c.h.b16 %v586
        %v1230 = vunpack.c.l.b16 %v587
        %v1231 = vunpack.c.h.b16 %v587
        %v1232 = vunpack.c.l.b16 %v588
        %v1233 = vunpack.c.h.b16 %v588
        %v1234 = vunpack.c.l.b16 %v589
        %v1235 = vunpack.c.h.b16 %v589
        %v1236 = vunpack.c.l.b16 %v590
        %v1237 = vunpack.c.h.b16 %v590
        %v1238 = vunpack.c.l.b16 %v591
        %v1239 = vunpack.c.h.b16 %v591
        %v1240 = vunpack.c.l.b16 %v592
        %v1241 = vunpack.c.h.b16 %v592
        %v1242 = vunpack.c.l.b16 %v593
        %v1243 = vunpack.c.h.b16 %v593
        %v1244 = vunpack.c.l.b16 %v594
        %v1245 = vunpack.c.h.b16 %v594
        %v1246 = vunpack.c.l.b16 %v595
        %v1247 = vunpack.c.h.b16 %v595
        %v1248 = vunpack.c.l.b16 %v596
        %v1249 = vunpack.c.h.b16 %v596
        %v1250 = vunpack.c.l.b16 %v597
        %v1251 = vunpack.c.h.b16 %v597
        %v1252 = vunpack.c.l.b16 %v598
        %v1253 = vunpack.c.h.b16 %v598
        %v1254 = vunpack.c.l.b16 %v599
        %v1255 = vunpack.c.h.b16 %v599
        %v1256 = vunpack.c.l.b16 %v600
        %v1257 = vunpack.c.h.b16 %v600
        %v1258 = vunpack.c.l.b16 %v601
        %v1259 = vunpack.c.h.b16 %v601
        %v1260 = vunpack.c.l.b16 %v602
        %v1261 = vunpack.c.h.b16 %v602
        %v1262 = vunpack.c.l.b16 %v603
        %v1263 = vunpack.c.h.b16 %v603
        %v1264 = vunpack.c.l.b16 %v604
        %v1265 = vunpack.c.h.b16 %v604
        %v1266 = vunpack.c.l.b16 %v605
        %v1267 = vunpack.c.h.b16 %v605
        %v1268 = vunpack.c.l.b16 %v606
        %v1269 = vunpack.c.h.b16 %v606
        %v1270 = vunpack.c.l.b16 %v607
        %v1271 = vunpack.c.h.b16 %v607
        %v1272 = vunpack.c.l.b16 %v608
        %v1273 = vunpack.c.h.b16 %v608
        %v1274 = vunpack.c.l.b16 %v609
        %v1275 = vunpack.c.h.b16 %v609
        %v1276 = vunpack.c.l.b16 %v610
        %v1277 = vunpack.c.h.b16 %v610
        %v1278 = vunpack.c.l.b16 %v611
        %v1279 = vunpack.c.h.b16 %v611
        %v1280 = vunpack.c.l.b16 %v612
        %v1281 = vunpack.c.h.b16 %v612
        %v1282 = vunpack.c.l.b16 %v613
        %v1283 = vunpack.c.h.b16 %v613
        %v1284 = vunpack.c.l.b16 %v614
        %v1285 = vunpack.c.h.b16 %v614
        %v1286 = vunpack.c.l.b16 %v615
        %v1287 = vunpack.c.h.b16 %v615
        %v1288 = vunpack.c.l.b16 %v616
        %v1289 = vunpack.c.h.b16 %v616
        %v1290 = vunpack.c.l.b16 %v617
        %v1291 = vunpack.c.h.b16 %v617
        %v1292 = vunpack.c.l.b16 %v618
        %v1293 = vunpack.c.h.b16 %v618
        %v1294 = vunpack.c.l.b16 %v619
        %v1295 = vunpack.c.h.b16 %v619
        %v1296 = vunpack.c.l.b16 %v620
        %v1297 = vunpack.c.h.b16 %v620
        %v1298 = vunpack.c.l.b16 %v621
        %v1299 = vunpack.c.h.b16 %v621
        %v1300 = vunpack.c.l.b16 %v622
        %v1301 = vunpack.c.h.b16 %v622
        %v1302 = vunpack.c.l.b16 %v623
        %v1303 = vunpack.c.h.b16 %v623
        %v1304 = vunpack.c.l.b16 %v624
        %v1305 = vunpack.c.h.b16 %v624
        %v1306 = vunpack.c.l.b16 %v625
        %v1307 = vunpack.c.h.b16 %v625
        %v1308 = vunpack.c.l.b16 %v626
        %v1309 = vunpack.c.h.b16 %v626
        %v1310 = vunpack.c.l.b16 %v627
        %v1311 = vunpack.c.h.b16 %v627
        %v1312 = vunpack.c.l.b16 %v628
        %v1313 = vunpack.c.h.b16 %v628
        %v1314 = vunpack.c.l.b16 %v629
        %v1315 = vunpack.c.h.b16 %v629
        %v1316 = vunpack.c.l.b16 %v630
        %v1317 = vunpack.c.h.b16 %v630
        %v1318 = vunpack.c.l.b16 %v631
        %v1319 = vunpack.c.h.b16 %v631
        %v1320 = vunpack.c.l.b16 %v632
        %v1321 = vunpack.c.h.b16 %v632
        %v1322 = vunpack.c.l.b16 %v633
        %v1323 = vunpack.c.h.b16 %v633
        %v1324 = vunpack.c.l.b16 %v634
        %v1325 = vunpack.c.h.b16 %v634
        %v1326 = vunpack.c.l.b16 %v635
        %v1327 = vunpack.c.h.b16 %v635
        %v1328 = vunpack.c.l.b16 %v636
        %v1329 = vunpack.c.h.b16 %v636
        %v1330 = vunpack.c.l.b16 %v637
        %v1331 = vunpack.c.h.b16 %v637
        %v1332 = vunpack.c.l.b16 %v638
        %v1333 = vunpack.c.h.b16 %v638
        %v1334 = vunpack.c.l.b16 %v639
        %v1335 = vunpack.c.h.b16 %v639
        %v1336 = vunpack.c.l.b16 %v640
        %v1337 = vunpack.c.h.b16 %v640
        %v1338 = vunpack.c.l.b16 %v641
        %v1339 = vunpack.c.h.b16 %v641
        %v1340 = vunpack.c.l.b16 %v642
        %v1341 = vunpack.c.h.b16 %v642
        %v1342 = vunpack.c.l.b16 %v643
        %v1343 = vunpack.c.h.b16 %v643
        %v1344 = vunpack.c.l.b16 %v644
        %v1345 = vunpack.c.h.b16 %v644
        %v1346 = vunpack.c.l.b16 %v645
        %v1347 = vunpack.c.h.b16 %v645
        %v1348 = vunpack.c.l.b16 %v646
        %v1349 = vunpack.c.h.b16 %v646
        %v1350 = vunpack.c.l.b16 %v647
        %v1351 = vunpack.c.h.b16 %v647
        %v1352 = vunpack.c.l.b16 %v648
        %v1353 = vunpack.c.h.b16 %v648
        %v1354 = vunpack.c.l.b16 %v649
        %v1355 = vunpack.c.h.b16 %v649
        %v1356 = vunpack.c.l.b16 %v650
        %v1357 = vunpack.c.h.b16 %v650
        %v1358 = vunpack.c.l.b16 %v651
        %v1359 = vunpack.c.h.b16 %v651
        %v1360 = vunpack.c.l.b16 %v652
        %v1361 = vunpack.c.h.b16 %v652
        %v1362 = vunpack.c.l.b16 %v653
        %v1363 = vunpack.c.h.b16 %v653
        %v1364 = vunpack.c.l.b16 %v654
        %v1365 = vunpack.c.h.b16 %v654
        %v1366 = vunpack.c.l.b16 %v655
        %v1367 = vunpack.c.h.b16 %v655
        %v1368 = vunpack.c.l.b16 %v656
        %v1369 = vunpack.c.h.b16 %v656
        %v1370 = vunpack.c.l.b16 %v657
        %v1371 = vunpack.c.h.b16 %v657
        %v1372 = vunpack.c.l.b16 %v658
        %v1373 = vunpack.c.h.b16 %v658
        %v1374 = vunpack.c.l.b16 %v659
        %v1375 = vunpack.c.h.b16 %v659
        %v1376 = vunpack.c.l.b16 %v660
        %v1377 = vunpack.c.h.b16 %v660
        %v1378 = vunpack.c.l.b16 %v661
        %v1379 = vunpack.c.h.b16 %v661
        %v1380 = vunpack.c.l.b16 %v662
        %v1381 = vunpack.c.h.b16 %v662
        %v1382 = vunpack.c.l.b16 %v663
        %v1383 = vunpack.c.h.b16 %v663
        %v1384 = vunpack.c.l.b16 %v664
        %v1385 = vunpack.c.h.b16 %v664
        %v1386 = vunpack.c.l.b16 %v665
        %v1387 = vunpack.c.h.b16 %v665
        %v1388 = vunpack.c.l.b16 %v666
        %v1389 = vunpack.c.h.b16 %v666
        %v1390 = vunpack.c.l.b16 %v667
        %v1391 = vunpack.c.h.b16 %v667
        %v1392 = vunpack.c.l.b16 %v668
        %v1393 = vunpack.c.h.b16 %v668
        %v1394 = vunpack.c.l.b16 %v669
        %v1395 = vunpack.c.h.b16 %v669
        %v1396 = vunpack.c.l.b16 %v670
        %v1397 = vunpack.c.h.b16 %v670
        %v1398 = vunpack.c.l.b16 %v671
        %v1399 = vunpack.c.h.b16 %v671
        %v1400 = vunpack.c.l.b16 %v672
        %v1401 = vunpack.c.h.b16 %v672
        %v1402 = vunpack.c.l.b16 %v673
        %v1403 = vunpack.c.h.b16 %v673
        %v1404 = vunpack.c.l.b16 %v674
        %v1405 = vunpack.c.h.b16 %v674
        %v1406 = vunpack.c.l.b16 %v675
        %v1407 = vunpack.c.h.b16 %v675
        %v1408 = vunpack.c.l.b16 %v676
        %v1409 = vunpack.c.h.b16 %v676
        %v1410 = vunpack.c.l.b16 %v677
        %v1411 = vunpack.c.h.b16 %v677
        %v1412 = vunpack.c.l.b16 %v678
        %v1413 = vunpack.c.h.b16 %v678
        %v1414 = vunpack.c.l.b16 %v679
        %v1415 = vunpack.c.h.b16 %v679
        %v1416 = vunpack.c.l.b16 %v680
        %v1417 = vunpack.c.h.b16 %v680
        %v1418 = vunpack.c.l.b16 %v681
        %v1419 = vunpack.c.h.b16 %v681
        %v1420 = vunpack.c.l.b16 %v682
        %v1421 = vunpack.c.h.b16 %v682
        %v1422 = vunpack.c.l.b16 %v683
        %v1423 = vunpack.c.h.b16 %v683
        %v1424 = vunpack.c.l.b16 %v684
        %v1425 = vunpack.c.h.b16 %v684
        %v1426 = vunpack.c.l.b16 %v685
        %v1427 = vunpack.c.h.b16 %v685
        %v1428 = vunpack.c.l.b16 %v686
        %v1429 = vunpack.c.h.b16 %v686
        %v1430 = vunpack.c.l.b16 %v687
        %v1431 = vunpack.c.h.b16 %v687
        %v1432 = vunpack.c.l.b16 %v688
        %v1433 = vunpack.c.h.b16 %v688
        %v1434 = vunpack.c.l.b16 %v689
        %v1435 = vunpack.c.h.b16 %v689
        %v1436 = vunpack.c.l.b16 %v690
        %v1437 = vunpack.c.h.b16 %v690
        %v1438 = vunpack.c.l.b16 %v691
        %v1439 = vunpack.c.h.b16 %v691
        %v1440 = vunpack.c.l.b16 %v692
        %v1441 = vunpack.c.h.b16 %v692
        %v1442 = vunpack.c.l.b16 %v693
        %v1443 = vunpack.c.h.b16 %v693
        %v1444 = vunpack.c.l.b16 %v694
        %v1445 = vunpack.c.h.b16 %v694
        %v1446 = vunpack.c.l.b16 %v695
        %v1447 = vunpack.c.h.b16 %v695
        %v1448 = vunpack.c.l.b16 %v696
        %v1449 = vunpack.c.h.b16 %v696
        %v1450 = vunpack.c.l.b16 %v697
        %v1451 = vunpack.c.h.b16 %v697
        %v1452 = vunpack.c.l.b16 %v698
        %v1453 = vunpack.c.h.b16 %v698
        %v1454 = vunpack.c.l.b16 %v699
        %v1455 = vunpack.c.h.b16 %v699
        %v1456 = vunpack.c.l.b16 %v700
        %v1457 = vunpack.c.h.b16 %v700
        %v1458 = vunpack.c.l.b16 %v701
        %v1459 = vunpack.c.h.b16 %v701
        %v1460 = vunpack.c.l.b16 %v702
        %v1461 = vunpack.c.h.b16 %v702
        %v1462 = vunpack.c.l.b16 %v703
        %v1463 = vunpack.c.h.b16 %v703
        %v1464 = vunpack.c.l.b16 %v704
        %v1465 = vunpack.c.h.b16 %v704
        %v1466 = vunpack.c.l.b16 %v705
        %v1467 = vunpack.c.h.b16 %v705
        %v1468 = vunpack.c.l.b16 %v706
        %v1469 = vunpack.c.h.b16 %v706
        %v1470 = vunpack.c.l.b16 %v707
        %v1471 = vunpack.c.h.b16 %v707
        %v1472 = vunpack.c.l.b16 %v708
        %v1473 = vunpack.c.h.b16 %v708
        %v1474 = vunpack.c.l.b16 %v709
        %v1475 = vunpack.c.h.b16 %v709
        %v1476 = vunpack.c.l.b16 %v710
        %v1477 = vunpack.c.h.b16 %v710
        %v1478 = vunpack.c.l.b16 %v711
        %v1479 = vunpack.c.h.b16 %v711
        %v1480 = vunpack.c.l.b16 %v712
        %v1481 = vunpack.c.h.b16 %v712
        %v1482 = vunpack.c.l.b16 %v713
        %v1483 = vunpack.c.h.b16 %v713
        %v1484 = vunpack.c.l.b16 %v714
        %v1485 = vunpack.c.h.b16 %v714
        %v1486 = vunpack.c.l.b16 %v715
        %v1487 = vunpack.c.h.b16 %v715
        %v1488 = vunpack.c.l.b16 %v716
        %v1489 = vunpack.c.h.b16 %v716
        %v1490 = vunpack.c.l.b16 %v717
        %v1491 = vunpack.c.h.b16 %v717
        %v1492 = vunpack.c.l.b16 %v718
        %v1493 = vunpack.c.h.b16 %v718
        %v1494 = vunpack.c.l.b16 %v719
        %v1495 = vunpack.c.h.b16 %v719
        %v1496 = vunpack.c.l.b16 %v720
        %v1497 = vunpack.c.h.b16 %v720
        %v1498 = vunpack.c.l.b16 %v721
        %v1499 = vunpack.c.h.b16 %v721
        %v1500 = vunpack.c.l.b16 %v722
        %v1501 = vunpack.c.h.b16 %v722
        %v1502 = vunpack.c.l.b16 %v723
        %v1503 = vunpack.c.h.b16 %v723
        %v1504 = vunpack.c.l.b16 %v724
        %v1505 = vunpack.c.h.b16 %v724
        %v1506 = vunpack.c.l.b16 %v725
        %v1507 = vunpack.c.h.b16 %v725
        %v1508 = vunpack.c.l.b16 %v726
        %v1509 = vunpack.c.h.b16 %v726
        %v1510 = vunpack.c.l.b16 %v727
        %v1511 = vunpack.c.h.b16 %v727
        %v1512 = vunpack.c.l.b16 %v728
        %v1513 = vunpack.c.h.b16 %v728
        %v1514 = vunpack.c.l.b16 %v729
        %v1515 = vunpack.c.h.b16 %v729
        %v1516 = vunpack.c.l.b16 %v730
        %v1517 = vunpack.c.h.b16 %v730
        %v1518 = vunpack.c.l.b16 %v731
        %v1519 = vunpack.c.h.b16 %v731
        %v1520 = vunpack.c.l.b16 %v732
        %v1521 = vunpack.c.h.b16 %v732
        %v1522 = vunpack.c.l.b16 %v733
        %v1523 = vunpack.c.h.b16 %v733
        %v1524 = vpack.c.b16 %v1016, %v1012
        %v1525 = vpack.c.b16 %v1017, %v1013
        %v1526 = vpack.c.b16 %v1018, %v1014
        %v1527 = vpack.c.b16 %v1019, %v1015
        %v1528 = vpack.c.b16 %v1024, %v1020
        %v1529 = vpack.c.b16 %v1025, %v1021
        %v1530 = vpack.c.b16 %v1026, %v1022
        %v1531 = vpack.c.b16 %v1027, %v1023
        %v1532 = vpack.c.b16 %v1032, %v1028
        %v1533 = vpack.c.b16 %v1033, %v1029
        %v1534 = vpack.c.b16 %v1034, %v1030
        %v1535 = vpack.c.b16 %v1035, %v1031
        %v1536 = vpack.c.b16 %v1040, %v1036
        %v1537 = vpack.c.b16 %v1041, %v1037
        %v1538 = vpack.c.b16 %v1042, %v1038
        %v1539 = vpack.c.b16 %v1043, %v1039
        %v1540 = vpack.c.b16 %v1048, %v1044
        %v1541 = vpack.c.b16 %v1049, %v1045
        %v1542 = vpack.c.b16 %v1050, %v1046
        %v1543 = vpack.c.b16 %v1051, %v1047
        %v1544 = vpack.c.b16 %v1056, %v1052
        %v1545 = vpack.c.b16 %v1057, %v1053
        %v1546 = vpack.c.b16 %v1058, %v1054
        %v1547 = vpack.c.b16 %v1059, %v1055
        %v1548 = vpack.c.b16 %v1064, %v1060
        %v1549 = vpack.c.b16 %v1065, %v1061
        %v1550 = vpack.c.b16 %v1066, %v1062
        %v1551 = vpack.c.b16 %v1067, %v1063
        %v1552 = vpack.c.b16 %v1072, %v1068
        %v1553 = vpack.c.b16 %v1073, %v1069
        %v1554 = vpack.c.b16 %v1074, %v1070
        %v1555 = vpack.c.b16 %v1075, %v1071
        %v1556 = vpack.c.b16 %v1080, %v1076
        %v1557 = vpack.c.b16 %v1081, %v1077
        %v1558 = vpack.c.b16 %v1082, %v1078
        %v1559 = vpack.c.b16 %v1083, %v1079
        %v1560 = vpack.c.b16 %v1088, %v1084
        %v1561 = vpack.c.b16 %v1089, %v1085
        %v1562 = vpack.c.b16 %v1090, %v1086
        %v1563 = vpack.c.b16 %v1091, %v1087
        %v1564 = vpack.c.b16 %v1096, %v1092
        %v1565 = vpack.c.b16 %v1097, %v1093
        %v1566 = vpack.c.b16 %v1098, %v1094
        %v1567 = vpack.c.b16 %v1099, %v1095
        %v1568 = vpack.c.b16 %v1104, %v1100
        %v1569 = vpack.c.b16 %v1105, %v1101
        %v1570 = vpack.c.b16 %v1106, %v1102
        %v1571 = vpack.c.b16 %v1107, %v1103
        %v1572 = vpack.c.b16 %v1112, %v1108
        %v1573 = vpack.c.b16 %v1113, %v1109
        %v1574 = vpack.c.b16 %v1114, %v1110
        %v1575 = vpack.c.b16 %v1115, %v1111
        %v1576 = vpack.c.b16 %v1120, %v1116
        %v1577 = vpack.c.b16 %v1121, %v1117
        %v1578 = vpack.c.b16 %v1122, %v1118
        %v1579 = vpack.c.b16 %v1123, %v1119
        %v1580 = vpack.c.b16 %v1128, %v1124
        %v1581 = vpack.c.b16 %v1129, %v1125
        %v1582 = vpack.c.b16 %v1130, %v1126
        %v1583 = vpack.c.b16 %v1131, %v1127
        %v1584 = vpack.c.b16 %v1136, %v1132
        %v1585 = vpack.c.b16 %v1137, %v1133
        %v1586 = vpack.c.b16 %v1138, %v1134
        %v1587 = vpack.c.b16 %v1139, %v1135
        %v1588 = vpack.c.b16 %v1144, %v1140
        %v1589 = vpack.c.b16 %v1145, %v1141
        %v1590 = vpack.c.b16 %v1146, %v1142
        %v1591 = vpack.c.b16 %v1147, %v1143
        %v1592 = vpack.c.b16 %v1152, %v1148
        %v1593 = vpack.c.b16 %v1153, %v1149
        %v1594 = vpack.c.b16 %v1154, %v1150
        %v1595 = vpack.c.b16 %v1155, %v1151
        %v1596 = vpack.c.b16 %v1160, %v1156
        %v1597 = vpack.c.b16 %v1161, %v1157
        %v1598 = vpack.c.b16 %v1162, %v1158
        %v1599 = vpack.c.b16 %v1163, %v1159
        %v1600 = vpack.c.b16 %v1168, %v1164
        %v1601 = vpack.c.b16 %v1169, %v1165
        %v1602 = vpack.c.b16 %v1170, %v1166
        %v1603 = vpack.c.b16 %v1171, %v1167
        %v1604 = vpack.c.b16 %v1176, %v1172
        %v1605 = vpack.c.b16 %v1177, %v1173
        %v1606 = vpack.c.b16 %v1178, %v1174
        %v1607 = vpack.c.b16 %v1179, %v1175
        %v1608 = vpack.c.b16 %v1184, %v1180
        %v1609 = vpack.c.b16 %v1185, %v1181
        %v1610 = vpack.c.b16 %v1186, %v1182
        %v1611 = vpack.c.b16 %v1187, %v1183
        %v1612 = vpack.c.b16 %v1192, %v1188
        %v1613 = vpack.c.b16 %v1193, %v1189
        %v1614 = vpack.c.b16 %v1194, %v1190
        %v1615 = vpack.c.b16 %v1195, %v1191
        %v1616 = vpack.c.b16 %v1200, %v1196
        %v1617 = vpack.c.b16 %v1201, %v1197
        %v1618 = vpack.c.b16 %v1202, %v1198
        %v1619 = vpack.c.b16 %v1203, %v1199
        %v1620 = vpack.c.b16 %v1208, %v1204
        %v1621 = vpack.c.b16 %v1209, %v1205
        %v1622 = vpack.c.b16 %v1210, %v1206
        %v1623 = vpack.c.b16 %v1211, %v1207
        %v1624 = vpack.c.b16 %v1216, %v1212
        %v1625 = vpack.c.b16 %v1217, %v1213
        %v1626 = vpack.c.b16 %v1218, %v1214
        %v1627 = vpack.c.b16 %v1219, %v1215
        %v1628 = vpack.c.b16 %v1224, %v1220
        %v1629 = vpack.c.b16 %v1225, %v1221
        %v1630 = vpack.c.b16 %v1226, %v1222
        %v1631 = vpack.c.b16 %v1227, %v1223
        %v1632 = vpack.c.b16 %v1232, %v1228
        %v1633 = vpack.c.b16 %v1233, %v1229
        %v1634 = vpack.c.b16 %v1234, %v1230
        %v1635 = vpack.c.b16 %v1235, %v1231
        %v1636 = vpack.c.b16 %v1240, %v1236
        %v1637 = vpack.c.b16 %v1241, %v1237
        %v1638 = vpack.c.b16 %v1242, %v1238
        %v1639 = vpack.c.b16 %v1243, %v1239
        %v1640 = vpack.c.b16 %v1248, %v1244
        %v1641 = vpack.c.b16 %v1249, %v1245
        %v1642 = vpack.c.b16 %v1250, %v1246
        %v1643 = vpack.c.b16 %v1251, %v1247
        %v1644 = vpack.c.b16 %v1256, %v1252
        %v1645 = vpack.c.b16 %v1257, %v1253
        %v1646 = vpack.c.b16 %v1258, %v1254
        %v1647 = vpack.c.b16 %v1259, %v1255
        %v1648 = vpack.c.b16 %v1264, %v1260
        %v1649 = vpack.c.b16 %v1265, %v1261
        %v1650 = vpack.c.b16 %v1266, %v1262
        %v1651 = vpack.c.b16 %v1267, %v1263
        %v1652 = vpack.c.b16 %v1272, %v1268
        %v1653 = vpack.c.b16 %v1273, %v1269
        %v1654 = vpack.c.b16 %v1274, %v1270
        %v1655 = vpack.c.b16 %v1275, %v1271
        %v1656 = vpack.c.b16 %v1280, %v1276
        %v1657 = vpack.c.b16 %v1281, %v1277
        %v1658 = vpack.c.b16 %v1282, %v1278
        %v1659 = vpack.c.b16 %v1283, %v1279
        %v1660 = vpack.c.b16 %v1288, %v1284
        %v1661 = vpack.c.b16 %v1289, %v1285
        %v1662 = vpack.c.b16 %v1290, %v1286
        %v1663 = vpack.c.b16 %v1291, %v1287
        %v1664 = vpack.c.b16 %v1296, %v1292
        %v1665 = vpack.c.b16 %v1297, %v1293
        %v1666 = vpack.c.b16 %v1298, %v1294
        %v1667 = vpack.c.b16 %v1299, %v1295
        %v1668 = vpack.c.b16 %v1304, %v1300
        %v1669 = vpack.c.b16 %v1305, %v1301
        %v1670 = vpack.c.b16 %v1306, %v1302
        %v1671 = vpack.c.b16 %v1307, %v1303
        %v1672 = vpack.c.b16 %v1312, %v1308
        %v1673 = vpack.c.b16 %v1313, %v1309
        %v1674 = vpack.c.b16 %v1314, %v1310
        %v1675 = vpack.c.b16 %v1315, %v1311
        %v1676 = vpack.c.b16 %v1320, %v1316
        %v1677 = vpack.c.b16 %v1321, %v1317
        %v1678 = vpack.c.b16 %v1322, %v1318
        %v1679 = vpack.c.b16 %v1323, %v1319
        %v1680 = vpack.c.b16 %v1328, %v1324
        %v1681 = vpack.c.b16 %v1329, %v1325
        %v1682 = vpack.c.b16 %v1330, %v1326
        %v1683 = vpack.c.b16 %v1331, %v1327
        %v1684 = vpack.c.b16 %v1336, %v1332
        %v1685 = vpack.c.b16 %v1337, %v1333
        %v1686 = vpack.c.b16 %v1338, %v1334
        %v1687 = vpack.c.b16 %v1339, %v1335
        %v1688 = vpack.c.b16 %v1344, %v1340
        %v1689 = vpack.c.b16 %v1345, %v1341
        %v1690 = vpack.c.b16 %v1346, %v1342
        %v1691 = vpack.c.b16 %v1347, %v1343
        %v1692 = vpack.c.b16 %v1352, %v1348
        %v1693 = vpack.c.b16 %v1353, %v1349
        %v1694 = vpack.c.b16 %v1354, %v1350
        %v1695 = vpack.c.b16 %v1355, %v1351
        %v1696 = vpack.c.b16 %v1360, %v1356
        %v1697 = vpack.c.b16 %v1361, %v1357
        %v1698 = vpack.c.b16 %v1362, %v1358
        %v1699 = vpack.c.b16 %v1363, %v1359
        %v1700 = vpack.c.b16 %v1368, %v1364
        %v1701 = vpack.c.b16 %v1369, %v1365
        %v1702 = vpack.c.b16 %v1370, %v1366
        %v1703 = vpack.c.b16 %v1371, %v1367
        %v1704 = vpack.c.b16 %v1376, %v1372
        %v1705 = vpack.c.b16 %v1377, %v1373
        %v1706 = vpack.c.b16 %v1378, %v1374
        %v1707 = vpack.c.b16 %v1379, %v1375
        %v1708 = vpack.c.b16 %v1384, %v1380
        %v1709 = vpack.c.b16 %v1385, %v1381
        %v1710 = vpack.c.b16 %v1386, %v1382
        %v1711 = vpack.c.b16 %v1387, %v1383
        %v1712 = vpack.c.b16 %v1392, %v1388
        %v1713 = vpack.c.b16 %v1393, %v1389
        %v1714 = vpack.c.b16 %v1394, %v1390
        %v1715 = vpack.c.b16 %v1395, %v1391
        %v1716 = vpack.c.b16 %v1400, %v1396
        %v1717 = vpack.c.b16 %v1401, %v1397
        %v1718 = vpack.c.b16 %v1402, %v1398
        %v1719 = vpack.c.b16 %v1403, %v1399
        %v1720 = vpack.c.b16 %v1408, %v1404
        %v1721 = vpack.c.b16 %v1409, %v1405
        %v1722 = vpack.c.b16 %v1410, %v1406
        %v1723 = vpack.c.b16 %v1411, %v1407
        %v1724 = vpack.c.b16 %v1416, %v1412
        %v1725 = vpack.c.b16 %v1417, %v1413
        %v1726 = vpack.c.b16 %v1418, %v1414
        %v1727 = vpack.c.b16 %v1419, %v1415
        %v1728 = vpack.c.b16 %v1424, %v1420
        %v1729 = vpack.c.b16 %v1425, %v1421
        %v1730 = vpack.c.b16 %v1426, %v1422
        %v1731 = vpack.c.b16 %v1427, %v1423
        %v1732 = vpack.c.b16 %v1432, %v1428
        %v1733 = vpack.c.b16 %v1433, %v1429
        %v1734 = vpack.c.b16 %v1434, %v1430
        %v1735 = vpack.c.b16 %v1435, %v1431
        %v1736 = vpack.c.b16 %v1440, %v1436
        %v1737 = vpack.c.b16 %v1441, %v1437
        %v1738 = vpack.c.b16 %v1442, %v1438
        %v1739 = vpack.c.b16 %v1443, %v1439
        %v1740 = vpack.c.b16 %v1448, %v1444
        %v1741 = vpack.c.b16 %v1449, %v1445
        %v1742 = vpack.c.b16 %v1450, %v1446
        %v1743 = vpack.c.b16 %v1451, %v1447
        %v1744 = vpack.c.b16 %v1456, %v1452
        %v1745 = vpack.c.b16 %v1457, %v1453
        %v1746 = vpack.c.b16 %v1458, %v1454
        %v1747 = vpack.c.b16 %v1459, %v1455
        %v1748 = vpack.c.b16 %v1464, %v1460
        %v1749 = vpack.c.b16 %v1465, %v1461
        %v1750 = vpack.c.b16 %v1466, %v1462
        %v1751 = vpack.c.b16 %v1467, %v1463
        %v1752 = vpack.c.b16 %v1472, %v1468
        %v1753 = vpack.c.b16 %v1473, %v1469
        %v1754 = vpack.c.b16 %v1474, %v1470
        %v1755 = vpack.c.b16 %v1475, %v1471
        %v1756 = vpack.c.b16 %v1480, %v1476
        %v1757 = vpack.c.b16 %v1481, %v1477
        %v1758 = vpack.c.b16 %v1482, %v1478
        %v1759 = vpack.c.b16 %v1483, %v1479
        %v1760 = vpack.c.b16 %v1488, %v1484
        %v1761 = vpack.c.b16 %v1489, %v1485
        %v1762 = vpack.c.b16 %v1490, %v1486
        %v1763 = vpack.c.b16 %v1491, %v1487
        %v1764 = vpack.c.b16 %v1496, %v1492
        %v1765 = vpack.c.b16 %v1497, %v1493
        %v1766 = vpack.c.b16 %v1498, %v1494
        %v1767 = vpack.c.b16 %v1499, %v1495
        %v1768 = vpack.c.b16 %v1504, %v1500
        %v1769 = vpack.c.b16 %v1505, %v1501
        %v1770 = vpack.c.b16 %v1506, %v1502
        %v1771 = vpack.c.b16 %v1507, %v1503
        %v1772 = vpack.c.b16 %v1512, %v1508
        %v1773 = vpack.c.b16 %v1513, %v1509
        %v1774 = vpack.c.b16 %v1514, %v1510
        %v1775 = vpack.c.b16 %v1515, %v1511
        %v1776 = vpack.c.b16 %v1520, %v1516
        %v1777 = vpack.c.b16 %v1521, %v1517
        %v1778 = vpack.c.b16 %v1522, %v1518
        %v1779 = vpack.c.b16 %v1523, %v1519
        %2036 = vmatprep.subr.bf16.mxu0 %v1525
        %2037 = vmatpush1.bf16.msra.mxu0 %v1524
        %2038 = vmatprep.subr.bf16.mxu0 %v1529
        %2039 = vmatpush1.bf16.msra.mxu0 %v1528
        %2040 = vmatprep.subr.bf16.mxu0 %v1533
        %2041 = vmatpush1.bf16.msra.mxu0 %v1532
        %2042 = vmatprep.subr.bf16.mxu0 %v1537
        %2043 = vmatpush1.bf16.msra.mxu0 %v1536
        %2044 = vmatprep.subr.bf16.mxu0 %v1541
        %2045 = vmatpush1.bf16.msra.mxu0 %v1540
        %2046 = vmatprep.subr.bf16.mxu0 %v1545
        %2047 = vmatpush1.bf16.msra.mxu0 %v1544
        %2048 = vmatprep.subr.bf16.mxu0 %v1549
        %2049 = vmatpush1.bf16.msra.mxu0 %v1548
        %2050 = vmatprep.subr.bf16.mxu0 %v1553
        %2051 = vmatpush1.bf16.msra.mxu0 %v1552
        %2052 = vmatprep.subr.bf16.mxu0 %v1557
        %2053 = vmatpush1.bf16.msra.mxu0 %v1556
        %2054 = vmatprep.subr.bf16.mxu0 %v1561
        %2055 = vmatpush1.bf16.msra.mxu0 %v1560
        %2056 = vmatprep.subr.bf16.mxu0 %v1565
        %2057 = vmatpush1.bf16.msra.mxu0 %v1564
        %2058 = vmatprep.subr.bf16.mxu0 %v1569
        %2059 = vmatpush1.bf16.msra.mxu0 %v1568
        %2060 = vmatprep.subr.bf16.mxu0 %v1573
        %2061 = vmatpush1.bf16.msra.mxu0 %v1572
        %2062 = vmatprep.subr.bf16.mxu0 %v1577
        %2063 = vmatpush1.bf16.msra.mxu0 %v1576
        %2064 = vmatprep.subr.bf16.mxu0 %v1581
        %2065 = vmatpush1.bf16.msra.mxu0 %v1580
        %2066 = vmatprep.subr.bf16.mxu0 %v1585
        %2067 = vmatpush1.bf16.msra.mxu0 %v1584
        %2068 = vmatprep.mubr.bf16.mxu0 %v471
        %2069 = vmatmul.mubr.bf16.gmra.mrb[0].mxu0 %v470
        %v2070 = vpop.f32.mrb[0].mxu0
        %v2071 = vadd.f32 %v739, %v2070
        %v2072 = vpop.f32.mrb[0].mxu0
        %v2073 = vadd.f32 %v743, %v2072
        %v2074 = vpop.f32.mrb[0].mxu0
        %v2075 = vadd.f32 %v739, %v2074
        %v2076 = vpop.f32.mrb[0].mxu0
        %v2077 = vadd.f32 %v743, %v2076
        %2078 = vdwg.mxu0
        %2079 = vmatprep.subr.bf16.mxu0 %v1589
        %2080 = vmatpush1.bf16.msra.mxu0 %v1588
        %2081 = vmatprep.subr.bf16.mxu0 %v1593
        %2082 = vmatpush1.bf16.msra.mxu0 %v1592
        %2083 = vmatprep.subr.bf16.mxu0 %v1597
        %2084 = vmatpush1.bf16.msra.mxu0 %v1596
        %2085 = vmatprep.subr.bf16.mxu0 %v1601
        %2086 = vmatpush1.bf16.msra.mxu0 %v1600
        %2087 = vmatprep.subr.bf16.mxu0 %v1605
        %2088 = vmatpush1.bf16.msra.mxu0 %v1604
        %2089 = vmatprep.subr.bf16.mxu0 %v1609
        %2090 = vmatpush1.bf16.msra.mxu0 %v1608
        %2091 = vmatprep.subr.bf16.mxu0 %v1613
        %2092 = vmatpush1.bf16.msra.mxu0 %v1612
        %2093 = vmatprep.subr.bf16.mxu0 %v1617
        %2094 = vmatpush1.bf16.msra.mxu0 %v1616
        %2095 = vmatprep.subr.bf16.mxu0 %v1621
        %2096 = vmatpush1.bf16.msra.mxu0 %v1620
        %2097 = vmatprep.subr.bf16.mxu0 %v1625
        %2098 = vmatpush1.bf16.msra.mxu0 %v1624
        %2099 = vmatprep.subr.bf16.mxu0 %v1629
        %2100 = vmatpush1.bf16.msra.mxu0 %v1628
        %2101 = vmatprep.subr.bf16.mxu0 %v1633
        %2102 = vmatpush1.bf16.msra.mxu0 %v1632
        %2103 = vmatprep.subr.bf16.mxu0 %v1637
        %2104 = vmatpush1.bf16.msra.mxu0 %v1636
        %2105 = vmatprep.subr.bf16.mxu0 %v1641
        %2106 = vmatpush1.bf16.msra.mxu0 %v1640
        %2107 = vmatprep.subr.bf16.mxu0 %v1645
        %2108 = vmatpush1.bf16.msra.mxu0 %v1644
        %2109 = vmatprep.subr.bf16.mxu0 %v1649
        %2110 = vmatpush1.bf16.msra.mxu0 %v1648
        %2111 = vmatprep.mubr.bf16.mxu0 %v473
        %2112 = vmatmul.mubr.bf16.gmra.mrb[0].mxu0 %v472
        %v2113 = vpop.f32.mrb[0].mxu0
        %v2114 = vadd.f32 %v2071, %v2113
        %v2115 = vpop.f32.mrb[0].mxu0
        %v2116 = vadd.f32 %v2073, %v2115
        %v2117 = vpop.f32.mrb[0].mxu0
        %v2118 = vadd.f32 %v2075, %v2117
        %v2119 = vpop.f32.mrb[0].mxu0
        %v2120 = vadd.f32 %v2077, %v2119
        %2121 = vdwg.mxu0
        %2122 = vmatprep.subr.bf16.mxu0 %v1653
        %2123 = vmatpush1.bf16.msra.mxu0 %v1652
        %2124 = vmatprep.subr.bf16.mxu0 %v1657
        %2125 = vmatpush1.bf16.msra.mxu0 %v1656
        %2126 = vmatprep.subr.bf16.mxu0 %v1661
        %2127 = vmatpush1.bf16.msra.mxu0 %v1660
        %2128 = vmatprep.subr.bf16.mxu0 %v1665
        %2129 = vmatpush1.bf16.msra.mxu0 %v1664
        %2130 = vmatprep.subr.bf16.mxu0 %v1669
        %2131 = vmatpush1.bf16.msra.mxu0 %v1668
        %2132 = vmatprep.subr.bf16.mxu0 %v1673
        %2133 = vmatpush1.bf16.msra.mxu0 %v1672
        %2134 = vmatprep.subr.bf16.mxu0 %v1677
        %2135 = vmatpush1.bf16.msra.mxu0 %v1676
        %2136 = vmatprep.subr.bf16.mxu0 %v1681
        %2137 = vmatpush1.bf16.msra.mxu0 %v1680
        %2138 = vmatprep.subr.bf16.mxu0 %v1685
        %2139 = vmatpush1.bf16.msra.mxu0 %v1684
        %2140 = vmatprep.subr.bf16.mxu0 %v1689
        %2141 = vmatpush1.bf16.msra.mxu0 %v1688
        %2142 = vmatprep.subr.bf16.mxu0 %v1693
        %2143 = vmatpush1.bf16.msra.mxu0 %v1692
        %2144 = vmatprep.subr.bf16.mxu0 %v1697
        %2145 = vmatpush1.bf16.msra.mxu0 %v1696
        %2146 = vmatprep.subr.bf16.mxu0 %v1701
        %2147 = vmatpush1.bf16.msra.mxu0 %v1700
        %2148 = vmatprep.subr.bf16.mxu0 %v1705
        %2149 = vmatpush1.bf16.msra.mxu0 %v1704
        %2150 = vmatprep.subr.bf16.mxu0 %v1709
        %2151 = vmatpush1.bf16.msra.mxu0 %v1708
        %2152 = vmatprep.subr.bf16.mxu0 %v1713
        %2153 = vmatpush1.bf16.msra.mxu0 %v1712
        %2154 = vmatprep.mubr.bf16.mxu0 %v475
        %2155 = vmatmul.mubr.bf16.gmra.mrb[0].mxu0 %v474
        %v2156 = vpop.f32.mrb[0].mxu0
        %v2157 = vadd.f32 %v2114, %v2156
        %v2158 = vpop.f32.mrb[0].mxu0
        %v2159 = vadd.f32 %v2116, %v2158
        %v2160 = vpop.f32.mrb[0].mxu0
        %v2161 = vadd.f32 %v2118, %v2160
        %v2162 = vpop.f32.mrb[0].mxu0
        %v2163 = vadd.f32 %v2120, %v2162
        %2164 = vdwg.mxu0
        %2165 = vmatprep.subr.bf16.mxu0 %v1717
        %2166 = vmatpush1.bf16.msra.mxu0 %v1716
        %2167 = vmatprep.subr.bf16.mxu0 %v1721
        %2168 = vmatpush1.bf16.msra.mxu0 %v1720
        %2169 = vmatprep.subr.bf16.mxu0 %v1725
        %2170 = vmatpush1.bf16.msra.mxu0 %v1724
        %2171 = vmatprep.subr.bf16.mxu0 %v1729
        %2172 = vmatpush1.bf16.msra.mxu0 %v1728
        %2173 = vmatprep.subr.bf16.mxu0 %v1733
        %2174 = vmatpush1.bf16.msra.mxu0 %v1732
        %2175 = vmatprep.subr.bf16.mxu0 %v1737
        %2176 = vmatpush1.bf16.msra.mxu0 %v1736
        %2177 = vmatprep.subr.bf16.mxu0 %v1741
        %2178 = vmatpush1.bf16.msra.mxu0 %v1740
        %2179 = vmatprep.subr.bf16.mxu0 %v1745
        %2180 = vmatpush1.bf16.msra.mxu0 %v1744
        %2181 = vmatprep.subr.bf16.mxu0 %v1749
        %2182 = vmatpush1.bf16.msra.mxu0 %v1748
        %2183 = vmatprep.subr.bf16.mxu0 %v1753
        %2184 = vmatpush1.bf16.msra.mxu0 %v1752
        %2185 = vmatprep.subr.bf16.mxu0 %v1757
        %2186 = vmatpush1.bf16.msra.mxu0 %v1756
        %2187 = vmatprep.subr.bf16.mxu0 %v1761
        %2188 = vmatpush1.bf16.msra.mxu0 %v1760
        %2189 = vmatprep.subr.bf16.mxu0 %v1765
        %2190 = vmatpush1.bf16.msra.mxu0 %v1764
        %2191 = vmatprep.subr.bf16.mxu0 %v1769
        %2192 = vmatpush1.bf16.msra.mxu0 %v1768
        %2193 = vmatprep.subr.bf16.mxu0 %v1773
        %2194 = vmatpush1.bf16.msra.mxu0 %v1772
        %2195 = vmatprep.subr.bf16.mxu0 %v1777
        %2196 = vmatpush1.bf16.msra.mxu0 %v1776
        %2197 = vmatprep.mubr.bf16.mxu0 %v477
        %2198 = vmatmul.mubr.bf16.gmra.mrb[0].mxu0 %v476
        %v2199 = vpop.f32.mrb[0].mxu0
        %v2200 = vadd.f32 %v2157, %v2199
        %v2201 = vpop.f32.mrb[0].mxu0
        %v2202 = vadd.f32 %v2159, %v2201
        %v2203 = vpop.f32.mrb[0].mxu0
        %v2204 = vadd.f32 %v2161, %v2203
        %v2205 = vpop.f32.mrb[0].mxu0
        %v2206 = vadd.f32 %v2163, %v2205
        %2207 = vdwg.mxu0
        %2208 = vmatprep.subr.bf16.mxu0 %v1527
        %2209 = vmatpush1.bf16.msra.mxu0 %v1526
        %2210 = vmatprep.subr.bf16.mxu0 %v1531
        %2211 = vmatpush1.bf16.msra.mxu0 %v1530
        %2212 = vmatprep.subr.bf16.mxu0 %v1535
        %2213 = vmatpush1.bf16.msra.mxu0 %v1534
        %2214 = vmatprep.subr.bf16.mxu0 %v1539
        %2215 = vmatpush1.bf16.msra.mxu0 %v1538
        %2216 = vmatprep.subr.bf16.mxu0 %v1543
        %2217 = vmatpush1.bf16.msra.mxu0 %v1542
        %2218 = vmatprep.subr.bf16.mxu0 %v1547
        %2219 = vmatpush1.bf16.msra.mxu0 %v1546
        %2220 = vmatprep.subr.bf16.mxu0 %v1551
        %2221 = vmatpush1.bf16.msra.mxu0 %v1550
        %2222 = vmatprep.subr.bf16.mxu0 %v1555
        %2223 = vmatpush1.bf16.msra.mxu0 %v1554
        %2224 = vmatprep.subr.bf16.mxu0 %v1559
        %2225 = vmatpush1.bf16.msra.mxu0 %v1558
        %2226 = vmatprep.subr.bf16.mxu0 %v1563
        %2227 = vmatpush1.bf16.msra.mxu0 %v1562
        %2228 = vmatprep.subr.bf16.mxu0 %v1567
        %2229 = vmatpush1.bf16.msra.mxu0 %v1566
        %2230 = vmatprep.subr.bf16.mxu0 %v1571
        %2231 = vmatpush1.bf16.msra.mxu0 %v1570
        %2232 = vmatprep.subr.bf16.mxu0 %v1575
        %2233 = vmatpush1.bf16.msra.mxu0 %v1574
        %2234 = vmatprep.subr.bf16.mxu0 %v1579
        %2235 = vmatpush1.bf16.msra.mxu0 %v1578
        %2236 = vmatprep.subr.bf16.mxu0 %v1583
        %2237 = vmatpush1.bf16.msra.mxu0 %v1582
        %2238 = vmatprep.subr.bf16.mxu0 %v1587
        %2239 = vmatpush1.bf16.msra.mxu0 %v1586
        %2240 = vmatprep.mubr.bf16.mxu0 %v471
        %2241 = vmatmul.mubr.bf16.gmra.mrb[0].mxu0 %v470
        %v2242 = vpop.f32.mrb[0].mxu0
        %v2243 = vadd.f32 %v747, %v2242
        %v2244 = vpop.f32.mrb[0].mxu0
        %v2245 = vadd.f32 %v751, %v2244
        %v2246 = vpop.f32.mrb[0].mxu0
        %v2247 = vadd.f32 %v747, %v2246
        %v2248 = vpop.f32.mrb[0].mxu0
        %v2249 = vadd.f32 %v751, %v2248
        %2250 = vdwg.mxu0
        %2251 = vmatprep.subr.bf16.mxu0 %v1591
        %2252 = vmatpush1.bf16.msra.mxu0 %v1590
        %2253 = vmatprep.subr.bf16.mxu0 %v1595
        %2254 = vmatpush1.bf16.msra.mxu0 %v1594
        %2255 = vmatprep.subr.bf16.mxu0 %v1599
        %2256 = vmatpush1.bf16.msra.mxu0 %v1598
        %2257 = vmatprep.subr.bf16.mxu0 %v1603
        %2258 = vmatpush1.bf16.msra.mxu0 %v1602
        %2259 = vmatprep.subr.bf16.mxu0 %v1607
        %2260 = vmatpush1.bf16.msra.mxu0 %v1606
        %2261 = vmatprep.subr.bf16.mxu0 %v1611
        %2262 = vmatpush1.bf16.msra.mxu0 %v1610
        %2263 = vmatprep.subr.bf16.mxu0 %v1615
        %2264 = vmatpush1.bf16.msra.mxu0 %v1614
        %2265 = vmatprep.subr.bf16.mxu0 %v1619
        %2266 = vmatpush1.bf16.msra.mxu0 %v1618
        %2267 = vmatprep.subr.bf16.mxu0 %v1623
        %2268 = vmatpush1.bf16.msra.mxu0 %v1622
        %2269 = vmatprep.subr.bf16.mxu0 %v1627
        %2270 = vmatpush1.bf16.msra.mxu0 %v1626
        %2271 = vmatprep.subr.bf16.mxu0 %v1631
        %2272 = vmatpush1.bf16.msra.mxu0 %v1630
        %2273 = vmatprep.subr.bf16.mxu0 %v1635
        %2274 = vmatpush1.bf16.msra.mxu0 %v1634
        %2275 = vmatprep.subr.bf16.mxu0 %v1639
        %2276 = vmatpush1.bf16.msra.mxu0 %v1638
        %2277 = vmatprep.subr.bf16.mxu0 %v1643
        %2278 = vmatpush1.bf16.msra.mxu0 %v1642
        %2279 = vmatprep.subr.bf16.mxu0 %v1647
        %2280 = vmatpush1.bf16.msra.mxu0 %v1646
        %2281 = vmatprep.subr.bf16.mxu0 %v1651
        %2282 = vmatpush1.bf16.msra.mxu0 %v1650
        %2283 = vmatprep.mubr.bf16.mxu0 %v473
        %2284 = vmatmul.mubr.bf16.gmra.mrb[0].mxu0 %v472
        %v2285 = vpop.f32.mrb[0].mxu0
        %v2286 = vadd.f32 %v2243, %v2285
        %v2287 = vpop.f32.mrb[0].mxu0
        %v2288 = vadd.f32 %v2245, %v2287
        %v2289 = vpop.f32.mrb[0].mxu0
        %v2290 = vadd.f32 %v2247, %v2289
        %v2291 = vpop.f32.mrb[0].mxu0
        %v2292 = vadd.f32 %v2249, %v2291
        %2293 = vdwg.mxu0
        %2294 = vmatprep.subr.bf16.mxu0 %v1655
        %2295 = vmatpush1.bf16.msra.mxu0 %v1654
        %2296 = vmatprep.subr.bf16.mxu0 %v1659
        %2297 = vmatpush1.bf16.msra.mxu0 %v1658
        %2298 = vmatprep.subr.bf16.mxu0 %v1663
        %2299 = vmatpush1.bf16.msra.mxu0 %v1662
        %2300 = vmatprep.subr.bf16.mxu0 %v1667
        %2301 = vmatpush1.bf16.msra.mxu0 %v1666
        %2302 = vmatprep.subr.bf16.mxu0 %v1671
        %2303 = vmatpush1.bf16.msra.mxu0 %v1670
        %2304 = vmatprep.subr.bf16.mxu0 %v1675
        %2305 = vmatpush1.bf16.msra.mxu0 %v1674
        %2306 = vmatprep.subr.bf16.mxu0 %v1679
        %2307 = vmatpush1.bf16.msra.mxu0 %v1678
        %2308 = vmatprep.subr.bf16.mxu0 %v1683
        %2309 = vmatpush1.bf16.msra.mxu0 %v1682
        %2310 = vmatprep.subr.bf16.mxu0 %v1687
        %2311 = vmatpush1.bf16.msra.mxu0 %v1686
        %2312 = vmatprep.subr.bf16.mxu0 %v1691
        %2313 = vmatpush1.bf16.msra.mxu0 %v1690
        %2314 = vmatprep.subr.bf16.mxu0 %v1695
        %2315 = vmatpush1.bf16.msra.mxu0 %v1694
        %2316 = vmatprep.subr.bf16.mxu0 %v1699
        %2317 = vmatpush1.bf16.msra.mxu0 %v1698
        %2318 = vmatprep.subr.bf16.mxu0 %v1703
        %2319 = vmatpush1.bf16.msra.mxu0 %v1702
        %2320 = vmatprep.subr.bf16.mxu0 %v1707
        %2321 = vmatpush1.bf16.msra.mxu0 %v1706
        %2322 = vmatprep.subr.bf16.mxu0 %v1711
        %2323 = vmatpush1.bf16.msra.mxu0 %v1710
        %2324 = vmatprep.subr.bf16.mxu0 %v1715
        %2325 = vmatpush1.bf16.msra.mxu0 %v1714
        %2326 = vmatprep.mubr.bf16.mxu0 %v475
        %2327 = vmatmul.mubr.bf16.gmra.mrb[0].mxu0 %v474
        %v2328 = vpop.f32.mrb[0].mxu0
        %v2329 = vadd.f32 %v2286, %v2328
        %v2330 = vpop.f32.mrb[0].mxu0
        %v2331 = vadd.f32 %v2288, %v2330
        %v2332 = vpop.f32.mrb[0].mxu0
        %v2333 = vadd.f32 %v2290, %v2332
        %v2334 = vpop.f32.mrb[0].mxu0
        %v2335 = vadd.f32 %v2292, %v2334
        %2336 = vdwg.mxu0
        %2337 = vmatprep.subr.bf16.mxu0 %v1719
        %2338 = vmatpush1.bf16.msra.mxu0 %v1718
        %2339 = vmatprep.subr.bf16.mxu0 %v1723
        %2340 = vmatpush1.bf16.msra.mxu0 %v1722
        %2341 = vmatprep.subr.bf16.mxu0 %v1727
        %2342 = vmatpush1.bf16.msra.mxu0 %v1726
        %2343 = vmatprep.subr.bf16.mxu0 %v1731
        %2344 = vmatpush1.bf16.msra.mxu0 %v1730
        %2345 = vmatprep.subr.bf16.mxu0 %v1735
        %2346 = vmatpush1.bf16.msra.mxu0 %v1734
        %2347 = vmatprep.subr.bf16.mxu0 %v1739
        %2348 = vmatpush1.bf16.msra.mxu0 %v1738
        %2349 = vmatprep.subr.bf16.mxu0 %v1743
        %2350 = vmatpush1.bf16.msra.mxu0 %v1742
        %2351 = vmatprep.subr.bf16.mxu0 %v1747
        %2352 = vmatpush1.bf16.msra.mxu0 %v1746
        %2353 = vmatprep.subr.bf16.mxu0 %v1751
        %2354 = vmatpush1.bf16.msra.mxu0 %v1750
        %2355 = vmatprep.subr.bf16.mxu0 %v1755
        %2356 = vmatpush1.bf16.msra.mxu0 %v1754
        %2357 = vmatprep.subr.bf16.mxu0 %v1759
        %2358 = vmatpush1.bf16.msra.mxu0 %v1758
        %2359 = vmatprep.subr.bf16.mxu0 %v1763
        %2360 = vmatpush1.bf16.msra.mxu0 %v1762
        %2361 = vmatprep.subr.bf16.mxu0 %v1767
        %2362 = vmatpush1.bf16.msra.mxu0 %v1766
        %2363 = vmatprep.subr.bf16.mxu0 %v1771
        %2364 = vmatpush1.bf16.msra.mxu0 %v1770
        %2365 = vmatprep.subr.bf16.mxu0 %v1775
        %2366 = vmatpush1.bf16.msra.mxu0 %v1774
        %2367 = vmatprep.subr.bf16.mxu0 %v1779
        %2368 = vmatpush1.bf16.msra.mxu0 %v1778
        %2369 = vmatprep.mubr.bf16.mxu0 %v477
        %2370 = vmatmul.mubr.bf16.gmra.mrb[0].mxu0 %v476
        %v2371 = vpop.f32.mrb[0].mxu0
        %v2372 = vadd.f32 %v2329, %v2371
        %v2373 = vpop.f32.mrb[0].mxu0
        %v2374 = vadd.f32 %v2331, %v2373
        %v2375 = vpop.f32.mrb[0].mxu0
        %v2376 = vadd.f32 %v2333, %v2375
        %v2377 = vpop.f32.mrb[0].mxu0
        %v2378 = vadd.f32 %v2335, %v2377
        %2379 = vdwg.mxu0
        %v2380 = vmax.f32 %v2200, 0.0
        %v2381 = vmax.f32 %v2202, 0.0
        %v2382 = vmax.f32 %v2372, 0.0
        %v2383 = vmax.f32 %v2374, 0.0
        %v2384 = vmax.f32 %v2204, 0.0
        %v2385 = vmax.f32 %v2206, 0.0
        %v2386 = vmax.f32 %v2376, 0.0
        %v2387 = vmax.f32 %v2378, 0.0
        %v2388 = vpack.c.bf16 %v2384, %v2380
        %v2389 = vpack.c.bf16 %v2385, %v2381
        %v2390 = vpack.c.bf16 %v2386, %v2382
        %v2391 = vpack.c.bf16 %v2387, %v2383
        %v2392 = vld [vmem:[#allocation8] sm:$0xff]
        %v2393 = vld [vmem:[#allocation8 + $0x8] sm:$0xff]
        %v2394 = vld [vmem:[#allocation8 + $0x10] sm:$0xff]
        %v2395 = vld [vmem:[#allocation8 + $0x18] sm:$0xff]
        %v2396 = vld [vmem:[#allocation8 + $0x20] sm:$0xff]
        %v2397 = vld [vmem:[#allocation8 + $0x28] sm:$0xff]
        %v2398 = vld [vmem:[#allocation8 + $0x30] sm:$0xff]
        %v2399 = vld [vmem:[#allocation8 + $0x38] sm:$0xff]
        %v2400 = vld [vmem:[#allocation8 + $0x40] sm:$0xff]
        %v2401 = vld [vmem:[#allocation8 + $0x48] sm:$0xff]
        %v2402 = vld [vmem:[#allocation8 + $0x50] sm:$0xff]
        %v2403 = vld [vmem:[#allocation8 + $0x58] sm:$0xff]
        %v2404 = vld [vmem:[#allocation8 + $0x60] sm:$0xff]
        %v2405 = vld [vmem:[#allocation8 + $0x68] sm:$0xff]
        %v2406 = vld [vmem:[#allocation8 + $0x70] sm:$0xff]
        %v2407 = vld [vmem:[#allocation8 + $0x78] sm:$0xff]
        %v2408 = vld [vmem:[#allocation8 + $0x80] sm:$0xff]
        %v2409 = vld [vmem:[#allocation8 + $0x88] sm:$0xff]
        %v2410 = vld [vmem:[#allocation8 + $0x90] sm:$0xff]
        %v2411 = vld [vmem:[#allocation8 + $0x98] sm:$0xff]
        %v2412 = vld [vmem:[#allocation8 + $0xa0] sm:$0xff]
        %v2413 = vld [vmem:[#allocation8 + $0xa8] sm:$0xff]
        %v2414 = vld [vmem:[#allocation8 + $0xb0] sm:$0xff]
        %v2415 = vld [vmem:[#allocation8 + $0xb8] sm:$0xff]
        %v2416 = vld [vmem:[#allocation8 + $0xc0] sm:$0xff]
        %v2417 = vld [vmem:[#allocation8 + $0xc8] sm:$0xff]
        %v2418 = vld [vmem:[#allocation8 + $0xd0] sm:$0xff]
        %v2419 = vld [vmem:[#allocation8 + $0xd8] sm:$0xff]
        %v2420 = vld [vmem:[#allocation8 + $0xe0] sm:$0xff]
        %v2421 = vld [vmem:[#allocation8 + $0xe8] sm:$0xff]
        %v2422 = vld [vmem:[#allocation8 + $0xf0] sm:$0xff]
        %v2423 = vld [vmem:[#allocation8 + $0xf8] sm:$0xff]
        %v2424 = vld [vmem:[#allocation8 + $0x100] sm:$0xff]
        %v2425 = vld [vmem:[#allocation8 + $0x108] sm:$0xff]
        %v2426 = vld [vmem:[#allocation8 + $0x110] sm:$0xff]
        %v2427 = vld [vmem:[#allocation8 + $0x118] sm:$0xff]
        %v2428 = vld [vmem:[#allocation8 + $0x120] sm:$0xff]
        %v2429 = vld [vmem:[#allocation8 + $0x128] sm:$0xff]
        %v2430 = vld [vmem:[#allocation8 + $0x130] sm:$0xff]
        %v2431 = vld [vmem:[#allocation8 + $0x138] sm:$0xff]
        %v2432 = vld [vmem:[#allocation8 + $0x140] sm:$0xff]
        %v2433 = vld [vmem:[#allocation8 + $0x148] sm:$0xff]
        %v2434 = vld [vmem:[#allocation8 + $0x150] sm:$0xff]
        %v2435 = vld [vmem:[#allocation8 + $0x158] sm:$0xff]
        %v2436 = vld [vmem:[#allocation8 + $0x160] sm:$0xff]
        %v2437 = vld [vmem:[#allocation8 + $0x168] sm:$0xff]
        %v2438 = vld [vmem:[#allocation8 + $0x170] sm:$0xff]
        %v2439 = vld [vmem:[#allocation8 + $0x178] sm:$0xff]
        %v2440 = vld [vmem:[#allocation8 + $0x180] sm:$0xff]
        %v2441 = vld [vmem:[#allocation8 + $0x188] sm:$0xff]
        %v2442 = vld [vmem:[#allocation8 + $0x190] sm:$0xff]
        %v2443 = vld [vmem:[#allocation8 + $0x198] sm:$0xff]
        %v2444 = vld [vmem:[#allocation8 + $0x1a0] sm:$0xff]
        %v2445 = vld [vmem:[#allocation8 + $0x1a8] sm:$0xff]
        %v2446 = vld [vmem:[#allocation8 + $0x1b0] sm:$0xff]
        %v2447 = vld [vmem:[#allocation8 + $0x1b8] sm:$0xff]
        %v2448 = vld [vmem:[#allocation8 + $0x1c0] sm:$0xff]
        %v2449 = vld [vmem:[#allocation8 + $0x1c8] sm:$0xff]
        %v2450 = vld [vmem:[#allocation8 + $0x1d0] sm:$0xff]
        %v2451 = vld [vmem:[#allocation8 + $0x1d8] sm:$0xff]
        %v2452 = vld [vmem:[#allocation8 + $0x1e0] sm:$0xff]
        %v2453 = vld [vmem:[#allocation8 + $0x1e8] sm:$0xff]
        %v2454 = vld [vmem:[#allocation8 + $0x1f0] sm:$0xff]
        %v2455 = vld [vmem:[#allocation8 + $0x1f8] sm:$0xff]
        %v2456 = vld [vmem:[%s4] sm:$0x3]
        %v2458 = vlaneseq
        %v2459 = vshrl.u32 %v2458, 7
        %v2460 = vsub.s32 0, %v2459
        %v2461 = vrot.slane %v2456, %v2460
        %v2462 = vlaneseq
        %v2463 = vshrl.u32 %v2462, 7
        %v2464 = vsub.s32 1, %v2463
        %v2465 = vrot.slane %v2456, %v2464
        %v2532 = vunpack.c.l.b16 %v2392
        %v2533 = vunpack.c.h.b16 %v2392
        %v2534 = vunpack.c.l.b16 %v2393
        %v2535 = vunpack.c.h.b16 %v2393
        %v2536 = vunpack.c.l.b16 %v2394
        %v2537 = vunpack.c.h.b16 %v2394
        %v2538 = vunpack.c.l.b16 %v2395
        %v2539 = vunpack.c.h.b16 %v2395
        %v2540 = vunpack.c.l.b16 %v2396
        %v2541 = vunpack.c.h.b16 %v2396
        %v2542 = vunpack.c.l.b16 %v2397
        %v2543 = vunpack.c.h.b16 %v2397
        %v2544 = vunpack.c.l.b16 %v2398
        %v2545 = vunpack.c.h.b16 %v2398
        %v2546 = vunpack.c.l.b16 %v2399
        %v2547 = vunpack.c.h.b16 %v2399
        %v2548 = vunpack.c.l.b16 %v2400
        %v2549 = vunpack.c.h.b16 %v2400
        %v2550 = vunpack.c.l.b16 %v2401
        %v2551 = vunpack.c.h.b16 %v2401
        %v2552 = vunpack.c.l.b16 %v2402
        %v2553 = vunpack.c.h.b16 %v2402
        %v2554 = vunpack.c.l.b16 %v2403
        %v2555 = vunpack.c.h.b16 %v2403
        %v2556 = vunpack.c.l.b16 %v2404
        %v2557 = vunpack.c.h.b16 %v2404
        %v2558 = vunpack.c.l.b16 %v2405
        %v2559 = vunpack.c.h.b16 %v2405
        %v2560 = vunpack.c.l.b16 %v2406
        %v2561 = vunpack.c.h.b16 %v2406
        %v2562 = vunpack.c.l.b16 %v2407
        %v2563 = vunpack.c.h.b16 %v2407
        %v2564 = vunpack.c.l.b16 %v2408
        %v2565 = vunpack.c.h.b16 %v2408
        %v2566 = vunpack.c.l.b16 %v2409
        %v2567 = vunpack.c.h.b16 %v2409
        %v2568 = vunpack.c.l.b16 %v2410
        %v2569 = vunpack.c.h.b16 %v2410
        %v2570 = vunpack.c.l.b16 %v2411
        %v2571 = vunpack.c.h.b16 %v2411
        %v2572 = vunpack.c.l.b16 %v2412
        %v2573 = vunpack.c.h.b16 %v2412
        %v2574 = vunpack.c.l.b16 %v2413
        %v2575 = vunpack.c.h.b16 %v2413
        %v2576 = vunpack.c.l.b16 %v2414
        %v2577 = vunpack.c.h.b16 %v2414
        %v2578 = vunpack.c.l.b16 %v2415
        %v2579 = vunpack.c.h.b16 %v2415
        %v2580 = vunpack.c.l.b16 %v2416
        %v2581 = vunpack.c.h.b16 %v2416
        %v2582 = vunpack.c.l.b16 %v2417
        %v2583 = vunpack.c.h.b16 %v2417
        %v2584 = vunpack.c.l.b16 %v2418
        %v2585 = vunpack.c.h.b16 %v2418
        %v2586 = vunpack.c.l.b16 %v2419
        %v2587 = vunpack.c.h.b16 %v2419
        %v2588 = vunpack.c.l.b16 %v2420
        %v2589 = vunpack.c.h.b16 %v2420
        %v2590 = vunpack.c.l.b16 %v2421
        %v2591 = vunpack.c.h.b16 %v2421
        %v2592 = vunpack.c.l.b16 %v2422
        %v2593 = vunpack.c.h.b16 %v2422
        %v2594 = vunpack.c.l.b16 %v2423
        %v2595 = vunpack.c.h.b16 %v2423
        %v2596 = vunpack.c.l.b16 %v2424
        %v2597 = vunpack.c.h.b16 %v2424
        %v2598 = vunpack.c.l.b16 %v2425
        %v2599 = vunpack.c.h.b16 %v2425
        %v2600 = vunpack.c.l.b16 %v2426
        %v2601 = vunpack.c.h.b16 %v2426
        %v2602 = vunpack.c.l.b16 %v2427
        %v2603 = vunpack.c.h.b16 %v2427
        %v2604 = vunpack.c.l.b16 %v2428
        %v2605 = vunpack.c.h.b16 %v2428
        %v2606 = vunpack.c.l.b16 %v2429
        %v2607 = vunpack.c.h.b16 %v2429
        %v2608 = vunpack.c.l.b16 %v2430
        %v2609 = vunpack.c.h.b16 %v2430
        %v2610 = vunpack.c.l.b16 %v2431
        %v2611 = vunpack.c.h.b16 %v2431
        %v2612 = vunpack.c.l.b16 %v2432
        %v2613 = vunpack.c.h.b16 %v2432
        %v2614 = vunpack.c.l.b16 %v2433
        %v2615 = vunpack.c.h.b16 %v2433
        %v2616 = vunpack.c.l.b16 %v2434
        %v2617 = vunpack.c.h.b16 %v2434
        %v2618 = vunpack.c.l.b16 %v2435
        %v2619 = vunpack.c.h.b16 %v2435
        %v2620 = vunpack.c.l.b16 %v2436
        %v2621 = vunpack.c.h.b16 %v2436
        %v2622 = vunpack.c.l.b16 %v2437
        %v2623 = vunpack.c.h.b16 %v2437
        %v2624 = vunpack.c.l.b16 %v2438
        %v2625 = vunpack.c.h.b16 %v2438
        %v2626 = vunpack.c.l.b16 %v2439
        %v2627 = vunpack.c.h.b16 %v2439
        %v2628 = vunpack.c.l.b16 %v2440
        %v2629 = vunpack.c.h.b16 %v2440
        %v2630 = vunpack.c.l.b16 %v2441
        %v2631 = vunpack.c.h.b16 %v2441
        %v2632 = vunpack.c.l.b16 %v2442
        %v2633 = vunpack.c.h.b16 %v2442
        %v2634 = vunpack.c.l.b16 %v2443
        %v2635 = vunpack.c.h.b16 %v2443
        %v2636 = vunpack.c.l.b16 %v2444
        %v2637 = vunpack.c.h.b16 %v2444
        %v2638 = vunpack.c.l.b16 %v2445
        %v2639 = vunpack.c.h.b16 %v2445
        %v2640 = vunpack.c.l.b16 %v2446
        %v2641 = vunpack.c.h.b16 %v2446
        %v2642 = vunpack.c.l.b16 %v2447
        %v2643 = vunpack.c.h.b16 %v2447
        %v2644 = vunpack.c.l.b16 %v2448
        %v2645 = vunpack.c.h.b16 %v2448
        %v2646 = vunpack.c.l.b16 %v2449
        %v2647 = vunpack.c.h.b16 %v2449
        %v2648 = vunpack.c.l.b16 %v2450
        %v2649 = vunpack.c.h.b16 %v2450
        %v2650 = vunpack.c.l.b16 %v2451
        %v2651 = vunpack.c.h.b16 %v2451
        %v2652 = vunpack.c.l.b16 %v2452
        %v2653 = vunpack.c.h.b16 %v2452
        %v2654 = vunpack.c.l.b16 %v2453
        %v2655 = vunpack.c.h.b16 %v2453
        %v2656 = vunpack.c.l.b16 %v2454
        %v2657 = vunpack.c.h.b16 %v2454
        %v2658 = vunpack.c.l.b16 %v2455
        %v2659 = vunpack.c.h.b16 %v2455
        %v2660 = vpack.c.b16 %v2534, %v2532
        %v2661 = vpack.c.b16 %v2535, %v2533
        %v2662 = vpack.c.b16 %v2538, %v2536
        %v2663 = vpack.c.b16 %v2539, %v2537
        %v2664 = vpack.c.b16 %v2542, %v2540
        %v2665 = vpack.c.b16 %v2543, %v2541
        %v2666 = vpack.c.b16 %v2546, %v2544
        %v2667 = vpack.c.b16 %v2547, %v2545
        %v2668 = vpack.c.b16 %v2550, %v2548
        %v2669 = vpack.c.b16 %v2551, %v2549
        %v2670 = vpack.c.b16 %v2554, %v2552
        %v2671 = vpack.c.b16 %v2555, %v2553
        %v2672 = vpack.c.b16 %v2558, %v2556
        %v2673 = vpack.c.b16 %v2559, %v2557
        %v2674 = vpack.c.b16 %v2562, %v2560
        %v2675 = vpack.c.b16 %v2563, %v2561
        %v2676 = vpack.c.b16 %v2566, %v2564
        %v2677 = vpack.c.b16 %v2567, %v2565
        %v2678 = vpack.c.b16 %v2570, %v2568
        %v2679 = vpack.c.b16 %v2571, %v2569
        %v2680 = vpack.c.b16 %v2574, %v2572
        %v2681 = vpack.c.b16 %v2575, %v2573
        %v2682 = vpack.c.b16 %v2578, %v2576
        %v2683 = vpack.c.b16 %v2579, %v2577
        %v2684 = vpack.c.b16 %v2582, %v2580
        %v2685 = vpack.c.b16 %v2583, %v2581
        %v2686 = vpack.c.b16 %v2586, %v2584
        %v2687 = vpack.c.b16 %v2587, %v2585
        %v2688 = vpack.c.b16 %v2590, %v2588
        %v2689 = vpack.c.b16 %v2591, %v2589
        %v2690 = vpack.c.b16 %v2594, %v2592
        %v2691 = vpack.c.b16 %v2595, %v2593
        %v2692 = vpack.c.b16 %v2598, %v2596
        %v2693 = vpack.c.b16 %v2599, %v2597
        %v2694 = vpack.c.b16 %v2602, %v2600
        %v2695 = vpack.c.b16 %v2603, %v2601
        %v2696 = vpack.c.b16 %v2606, %v2604
        %v2697 = vpack.c.b16 %v2607, %v2605
        %v2698 = vpack.c.b16 %v2610, %v2608
        %v2699 = vpack.c.b16 %v2611, %v2609
        %v2700 = vpack.c.b16 %v2614, %v2612
        %v2701 = vpack.c.b16 %v2615, %v2613
        %v2702 = vpack.c.b16 %v2618, %v2616
        %v2703 = vpack.c.b16 %v2619, %v2617
        %v2704 = vpack.c.b16 %v2622, %v2620
        %v2705 = vpack.c.b16 %v2623, %v2621
        %v2706 = vpack.c.b16 %v2626, %v2624
        %v2707 = vpack.c.b16 %v2627, %v2625
        %v2708 = vpack.c.b16 %v2630, %v2628
        %v2709 = vpack.c.b16 %v2631, %v2629
        %v2710 = vpack.c.b16 %v2634, %v2632
        %v2711 = vpack.c.b16 %v2635, %v2633
        %v2712 = vpack.c.b16 %v2638, %v2636
        %v2713 = vpack.c.b16 %v2639, %v2637
        %v2714 = vpack.c.b16 %v2642, %v2640
        %v2715 = vpack.c.b16 %v2643, %v2641
        %v2716 = vpack.c.b16 %v2646, %v2644
        %v2717 = vpack.c.b16 %v2647, %v2645
        %v2718 = vpack.c.b16 %v2650, %v2648
        %v2719 = vpack.c.b16 %v2651, %v2649
        %v2720 = vpack.c.b16 %v2654, %v2652
        %v2721 = vpack.c.b16 %v2655, %v2653
        %v2722 = vpack.c.b16 %v2658, %v2656
        %v2723 = vpack.c.b16 %v2659, %v2657
        %2788 = vmatprep.subr.bf16.mxu0 %v2661
        %2789 = vmatpush1.bf16.msra.mxu0 %v2660
        %2790 = vmatprep.subr.bf16.mxu0 %v2663
        %2791 = vmatpush1.bf16.msra.mxu0 %v2662
        %2792 = vmatprep.subr.bf16.mxu0 %v2665
        %2793 = vmatpush1.bf16.msra.mxu0 %v2664
        %2794 = vmatprep.subr.bf16.mxu0 %v2667
        %2795 = vmatpush1.bf16.msra.mxu0 %v2666
        %2796 = vmatprep.subr.bf16.mxu0 %v2669
        %2797 = vmatpush1.bf16.msra.mxu0 %v2668
        %2798 = vmatprep.subr.bf16.mxu0 %v2671
        %2799 = vmatpush1.bf16.msra.mxu0 %v2670
        %2800 = vmatprep.subr.bf16.mxu0 %v2673
        %2801 = vmatpush1.bf16.msra.mxu0 %v2672
        %2802 = vmatprep.subr.bf16.mxu0 %v2675
        %2803 = vmatpush1.bf16.msra.mxu0 %v2674
        %2804 = vmatprep.subr.bf16.mxu0 %v2677
        %2805 = vmatpush1.bf16.msra.mxu0 %v2676
        %2806 = vmatprep.subr.bf16.mxu0 %v2679
        %2807 = vmatpush1.bf16.msra.mxu0 %v2678
        %2808 = vmatprep.subr.bf16.mxu0 %v2681
        %2809 = vmatpush1.bf16.msra.mxu0 %v2680
        %2810 = vmatprep.subr.bf16.mxu0 %v2683
        %2811 = vmatpush1.bf16.msra.mxu0 %v2682
        %2812 = vmatprep.subr.bf16.mxu0 %v2685
        %2813 = vmatpush1.bf16.msra.mxu0 %v2684
        %2814 = vmatprep.subr.bf16.mxu0 %v2687
        %2815 = vmatpush1.bf16.msra.mxu0 %v2686
        %2816 = vmatprep.subr.bf16.mxu0 %v2689
        %2817 = vmatpush1.bf16.msra.mxu0 %v2688
        %2818 = vmatprep.subr.bf16.mxu0 %v2691
        %2819 = vmatpush1.bf16.msra.mxu0 %v2690
        %2820 = vmatprep.mubr.bf16.mxu0 %v2389
        %2821 = vmatmul.mubr.bf16.gmra.mrb[0].mxu0 %v2388
        %v2822 = vpop.f32.mrb[0].mxu0
        %v2823 = vadd.f32 %v2461, %v2822
        %v2824 = vpop.f32.mrb[0].mxu0
        %v2825 = vadd.f32 %v2465, %v2824
        %v2826 = vpop.f32.mrb[0].mxu0
        %v2827 = vadd.f32 %v2461, %v2826
        %v2828 = vpop.f32.mrb[0].mxu0
        %v2829 = vadd.f32 %v2465, %v2828
        %2830 = vdwg.mxu0
        %2831 = vmatprep.subr.bf16.mxu0 %v2693
        %2832 = vmatpush1.bf16.msra.mxu0 %v2692
        %2833 = vmatprep.subr.bf16.mxu0 %v2695
        %2834 = vmatpush1.bf16.msra.mxu0 %v2694
        %2835 = vmatprep.subr.bf16.mxu0 %v2697
        %2836 = vmatpush1.bf16.msra.mxu0 %v2696
        %2837 = vmatprep.subr.bf16.mxu0 %v2699
        %2838 = vmatpush1.bf16.msra.mxu0 %v2698
        %2839 = vmatprep.subr.bf16.mxu0 %v2701
        %2840 = vmatpush1.bf16.msra.mxu0 %v2700
        %2841 = vmatprep.subr.bf16.mxu0 %v2703
        %2842 = vmatpush1.bf16.msra.mxu0 %v2702
        %2843 = vmatprep.subr.bf16.mxu0 %v2705
        %2844 = vmatpush1.bf16.msra.mxu0 %v2704
        %2845 = vmatprep.subr.bf16.mxu0 %v2707
        %2846 = vmatpush1.bf16.msra.mxu0 %v2706
        %2847 = vmatprep.subr.bf16.mxu0 %v2709
        %2848 = vmatpush1.bf16.msra.mxu0 %v2708
        %2849 = vmatprep.subr.bf16.mxu0 %v2711
        %2850 = vmatpush1.bf16.msra.mxu0 %v2710
        %2851 = vmatprep.subr.bf16.mxu0 %v2713
        %2852 = vmatpush1.bf16.msra.mxu0 %v2712
        %2853 = vmatprep.subr.bf16.mxu0 %v2715
        %2854 = vmatpush1.bf16.msra.mxu0 %v2714
        %2855 = vmatprep.subr.bf16.mxu0 %v2717
        %2856 = vmatpush1.bf16.msra.mxu0 %v2716
        %2857 = vmatprep.subr.bf16.mxu0 %v2719
        %2858 = vmatpush1.bf16.msra.mxu0 %v2718
        %2859 = vmatprep.subr.bf16.mxu0 %v2721
        %2860 = vmatpush1.bf16.msra.mxu0 %v2720
        %2861 = vmatprep.subr.bf16.mxu0 %v2723
        %2862 = vmatpush1.bf16.msra.mxu0 %v2722
        %2863 = vmatprep.mubr.bf16.mxu0 %v2391
        %2864 = vmatmul.mubr.bf16.gmra.mrb[0].mxu0 %v2390
        %v2865 = vpop.f32.mrb[0].mxu0
        %v2866 = vadd.f32 %v2823, %v2865
        %v2867 = vpop.f32.mrb[0].mxu0
        %v2868 = vadd.f32 %v2825, %v2867
        %v2869 = vpop.f32.mrb[0].mxu0
        %v2870 = vadd.f32 %v2827, %v2869
        %v2871 = vpop.f32.mrb[0].mxu0
        %v2872 = vadd.f32 %v2829, %v2871
        %2873 = vdwg.mxu0
        %v2874 = vmax.f32 %v2866, 0.0
        %v2875 = vmax.f32 %v2868, 0.0
        %v2876 = vmax.f32 %v2870, 0.0
        %v2877 = vmax.f32 %v2872, 0.0
        %v2878 = vpack.c.bf16 %v2876, %v2874
        %v2879 = vpack.c.bf16 %v2877, %v2875
        %v2880 = vld [vmem:[#allocation9] sm:$0xf]
        %v2881 = vld [vmem:[#allocation9 + $0x4] sm:$0xf]
        %v2882 = vld [vmem:[#allocation9 + $0x8] sm:$0xf]
        %v2883 = vld [vmem:[#allocation9 + $0xc] sm:$0xf]
        %v2884 = vld [vmem:[#allocation9 + $0x10] sm:$0xf]
        %v2885 = vld [vmem:[#allocation9 + $0x14] sm:$0xf]
        %v2886 = vld [vmem:[#allocation9 + $0x18] sm:$0xf]
        %v2887 = vld [vmem:[#allocation9 + $0x1c] sm:$0xf]
        %v2888 = vld [vmem:[#allocation9 + $0x20] sm:$0xf]
        %v2889 = vld [vmem:[#allocation9 + $0x24] sm:$0xf]
        %v2890 = vld [vmem:[#allocation9 + $0x28] sm:$0xf]
        %v2891 = vld [vmem:[#allocation9 + $0x2c] sm:$0xf]
        %v2892 = vld [vmem:[#allocation9 + $0x30] sm:$0xf]
        %v2893 = vld [vmem:[#allocation9 + $0x34] sm:$0xf]
        %v2894 = vld [vmem:[#allocation9 + $0x38] sm:$0xf]
        %v2895 = vld [vmem:[#allocation9 + $0x3c] sm:$0xf]
        %v2896 = vld [vmem:[#allocation9 + $0x40] sm:$0xf]
        %v2897 = vld [vmem:[#allocation9 + $0x44] sm:$0xf]
        %v2898 = vld [vmem:[#allocation9 + $0x48] sm:$0xf]
        %v2899 = vld [vmem:[#allocation9 + $0x4c] sm:$0xf]
        %v2900 = vld [vmem:[#allocation9 + $0x50] sm:$0xf]
        %v2901 = vld [vmem:[#allocation9 + $0x54] sm:$0xf]
        %v2902 = vld [vmem:[#allocation9 + $0x58] sm:$0xf]
        %v2903 = vld [vmem:[#allocation9 + $0x5c] sm:$0xf]
        %v2904 = vld [vmem:[#allocation9 + $0x60] sm:$0xf]
        %v2905 = vld [vmem:[#allocation9 + $0x64] sm:$0xf]
        %v2906 = vld [vmem:[#allocation9 + $0x68] sm:$0xf]
        %v2907 = vld [vmem:[#allocation9 + $0x6c] sm:$0xf]
        %v2908 = vld [vmem:[#allocation9 + $0x70] sm:$0xf]
        %v2909 = vld [vmem:[#allocation9 + $0x74] sm:$0xf]
        %v2910 = vld [vmem:[#allocation9 + $0x78] sm:$0xf]
        %v2911 = vld [vmem:[#allocation9 + $0x7c] sm:$0xf]
        %v2912 = vld [vmem:[%s6] sm:$0x1]
        %v2914 = vlaneseq
        %v2915 = vshrl.u32 %v2914, 7
        %v2916 = vsub.s32 0, %v2915
        %v2917 = vrot.slane %v2912, %v2916
        %v2951 = vunpack.c.l.b16 %v2880
        %v2952 = vunpack.c.l.b16 %v2881
        %v2953 = vunpack.c.l.b16 %v2882
        %v2954 = vunpack.c.l.b16 %v2883
        %v2955 = vunpack.c.l.b16 %v2884
        %v2956 = vunpack.c.l.b16 %v2885
        %v2957 = vunpack.c.l.b16 %v2886
        %v2958 = vunpack.c.l.b16 %v2887
        %v2959 = vunpack.c.l.b16 %v2888
        %v2960 = vunpack.c.l.b16 %v2889
        %v2961 = vunpack.c.l.b16 %v2890
        %v2962 = vunpack.c.l.b16 %v2891
        %v2963 = vunpack.c.l.b16 %v2892
        %v2964 = vunpack.c.l.b16 %v2893
        %v2965 = vunpack.c.l.b16 %v2894
        %v2966 = vunpack.c.l.b16 %v2895
        %v2967 = vunpack.c.l.b16 %v2896
        %v2968 = vunpack.c.l.b16 %v2897
        %v2969 = vunpack.c.l.b16 %v2898
        %v2970 = vunpack.c.l.b16 %v2899
        %v2971 = vunpack.c.l.b16 %v2900
        %v2972 = vunpack.c.l.b16 %v2901
        %v2973 = vunpack.c.l.b16 %v2902
        %v2974 = vunpack.c.l.b16 %v2903
        %v2975 = vunpack.c.l.b16 %v2904
        %v2976 = vunpack.c.l.b16 %v2905
        %v2977 = vunpack.c.l.b16 %v2906
        %v2978 = vunpack.c.l.b16 %v2907
        %v2979 = vunpack.c.l.b16 %v2908
        %v2980 = vunpack.c.l.b16 %v2909
        %v2981 = vunpack.c.l.b16 %v2910
        %v2982 = vunpack.c.l.b16 %v2911
        %v2983 = vpack.c.b16 %v2952, %v2951
        %v2984 = vpack.c.b16 %v2954, %v2953
        %v2985 = vpack.c.b16 %v2956, %v2955
        %v2986 = vpack.c.b16 %v2958, %v2957
        %v2987 = vpack.c.b16 %v2960, %v2959
        %v2988 = vpack.c.b16 %v2962, %v2961
        %v2989 = vpack.c.b16 %v2964, %v2963
        %v2990 = vpack.c.b16 %v2966, %v2965
        %v2991 = vpack.c.b16 %v2968, %v2967
        %v2992 = vpack.c.b16 %v2970, %v2969
        %v2993 = vpack.c.b16 %v2972, %v2971
        %v2994 = vpack.c.b16 %v2974, %v2973
        %v2995 = vpack.c.b16 %v2976, %v2975
        %v2996 = vpack.c.b16 %v2978, %v2977
        %v2997 = vpack.c.b16 %v2980, %v2979
        %v2998 = vpack.c.b16 %v2982, %v2981
        %3015 = vmatprep.subr.bf16.mxu0 0
        %3016 = vmatpush1.bf16.msra.mxu0 %v2983
        %3017 = vmatprep.subr.bf16.mxu0 0
        %3018 = vmatpush1.bf16.msra.mxu0 %v2984
        %3019 = vmatprep.subr.bf16.mxu0 0
        %3020 = vmatpush1.bf16.msra.mxu0 %v2985
        %3021 = vmatprep.subr.bf16.mxu0 0
        %3022 = vmatpush1.bf16.msra.mxu0 %v2986
        %3023 = vmatprep.subr.bf16.mxu0 0
        %3024 = vmatpush1.bf16.msra.mxu0 %v2987
        %3025 = vmatprep.subr.bf16.mxu0 0
        %3026 = vmatpush1.bf16.msra.mxu0 %v2988
        %3027 = vmatprep.subr.bf16.mxu0 0
        %3028 = vmatpush1.bf16.msra.mxu0 %v2989
        %3029 = vmatprep.subr.bf16.mxu0 0
        %3030 = vmatpush1.bf16.msra.mxu0 %v2990
        %3031 = vmatprep.subr.bf16.mxu0 0
        %3032 = vmatpush1.bf16.msra.mxu0 %v2991
        %3033 = vmatprep.subr.bf16.mxu0 0
        %3034 = vmatpush1.bf16.msra.mxu0 %v2992
        %3035 = vmatprep.subr.bf16.mxu0 0
        %3036 = vmatpush1.bf16.msra.mxu0 %v2993
        %3037 = vmatprep.subr.bf16.mxu0 0
        %3038 = vmatpush1.bf16.msra.mxu0 %v2994
        %3039 = vmatprep.subr.bf16.mxu0 0
        %3040 = vmatpush1.bf16.msra.mxu0 %v2995
        %3041 = vmatprep.subr.bf16.mxu0 0
        %3042 = vmatpush1.bf16.msra.mxu0 %v2996
        %3043 = vmatprep.subr.bf16.mxu0 0
        %3044 = vmatpush1.bf16.msra.mxu0 %v2997
        %3045 = vmatprep.subr.bf16.mxu0 0
        %3046 = vmatpush1.bf16.msra.mxu0 %v2998
        %3047 = vmatprep.mubr.bf16.mxu0 %v2879
        %3048 = vmatmul.mubr.bf16.gmra.mrb[0].mxu0 %v2878
        %v3049 = vpop.f32.mrb[0].mxu0
        %v3050 = vadd.f32 %v2917, %v3049
        %v3051 = vpop.f32.mrb[0].mxu0
        %v3052 = vpop.f32.mrb[0].mxu0
        %v3053 = vadd.f32 %v2917, %v3052
        %v3054 = vpop.f32.mrb[0].mxu0
        %3055 = vdwg.mxu0
        %v3056 = vmax.f32 %v3050, 0.0
        %v3057 = vmax.f32 %v3053, 0.0
        %v3058 = vpack.c.bf16 %v3057, %v3056
        %v3059 = vld [vmem:[#allocation11] sm:$0xf]
        %v3060 = vld [vmem:[#allocation11 + $0x4] sm:$0xf]
        %v3061 = vld [vmem:[#allocation11 + $0x8] sm:$0xf]
        %v3062 = vld [vmem:[#allocation11 + $0xc] sm:$0xf]
        %v3063 = vld [vmem:[#allocation11 + $0x10] sm:$0xf]
        %v3064 = vld [vmem:[#allocation11 + $0x14] sm:$0xf]
        %v3065 = vld [vmem:[#allocation11 + $0x18] sm:$0xf]
        %v3066 = vld [vmem:[#allocation11 + $0x1c] sm:$0xf]
        %v3067 = vld [vmem:[#allocation11 + $0x20] sm:$0xf]
        %v3068 = vld [vmem:[#allocation11 + $0x24] sm:$0xf]
        %v3069 = vld [vmem:[#allocation11 + $0x28] sm:$0xf]
        %v3070 = vld [vmem:[#allocation11 + $0x2c] sm:$0xf]
        %v3071 = vld [vmem:[#allocation11 + $0x30] sm:$0xf]
        %v3072 = vld [vmem:[#allocation11 + $0x34] sm:$0xf]
        %v3073 = vld [vmem:[#allocation11 + $0x38] sm:$0xf]
        %v3074 = vld [vmem:[#allocation11 + $0x3c] sm:$0xf]
        %v3075 = vld [vmem:[%s8] sm:$0x1]
        %v3077 = vlaneseq
        %v3078 = vshrl.u32 %v3077, 7
        %v3079 = vsub.s32 0, %v3078
        %v3080 = vrot.slane %v3075, %v3079
        %v3098 = vunpack.c.l.b16 %v3059
        %v3099 = vunpack.c.l.b16 %v3060
        %v3100 = vunpack.c.l.b16 %v3061
        %v3101 = vunpack.c.l.b16 %v3062
        %v3102 = vunpack.c.l.b16 %v3063
        %v3103 = vunpack.c.l.b16 %v3064
        %v3104 = vunpack.c.l.b16 %v3065
        %v3105 = vunpack.c.l.b16 %v3066
        %v3106 = vunpack.c.l.b16 %v3067
        %v3107 = vunpack.c.l.b16 %v3068
        %v3108 = vunpack.c.l.b16 %v3069
        %v3109 = vunpack.c.l.b16 %v3070
        %v3110 = vunpack.c.l.b16 %v3071
        %v3111 = vunpack.c.l.b16 %v3072
        %v3112 = vunpack.c.l.b16 %v3073
        %v3113 = vunpack.c.l.b16 %v3074
        %v3114 = vpack.c.b16 %v3099, %v3098
        %v3115 = vpack.c.b16 %v3101, %v3100
        %v3116 = vpack.c.b16 %v3103, %v3102
        %v3117 = vpack.c.b16 %v3105, %v3104
        %v3118 = vpack.c.b16 %v3107, %v3106
        %v3119 = vpack.c.b16 %v3109, %v3108
        %v3120 = vpack.c.b16 %v3111, %v3110
        %v3121 = vpack.c.b16 %v3113, %v3112
        %3130 = vmatprep.subr.bf16.mxu0 0
        %3131 = vmatpush1.bf16.msra.mxu0 %v3114
        %3132 = vmatprep.subr.bf16.mxu0 0
        %3133 = vmatpush1.bf16.msra.mxu0 %v3115
        %3134 = vmatprep.subr.bf16.mxu0 0
        %3135 = vmatpush1.bf16.msra.mxu0 %v3116
        %3136 = vmatprep.subr.bf16.mxu0 0
        %3137 = vmatpush1.bf16.msra.mxu0 %v3117
        %3138 = vmatprep.subr.bf16.mxu0 0
        %3139 = vmatpush1.bf16.msra.mxu0 %v3118
        %3140 = vmatprep.subr.bf16.mxu0 0
        %3141 = vmatpush1.bf16.msra.mxu0 %v3119
        %3142 = vmatprep.subr.bf16.mxu0 0
        %3143 = vmatpush1.bf16.msra.mxu0 %v3120
        %3144 = vmatprep.subr.bf16.mxu0 0
        %3145 = vmatpush1.bf16.msra.mxu0 %v3121
        %3146 = vmatprep.subr.bf16.mxu0 0
        %3147 = vmatpush1.bf16.msra.mxu0 0
        %3148 = vmatprep.subr.bf16.mxu0 0
        %3149 = vmatpush1.bf16.msra.mxu0 0
        %3150 = vmatprep.subr.bf16.mxu0 0
        %3151 = vmatpush1.bf16.msra.mxu0 0
        %3152 = vmatprep.subr.bf16.mxu0 0
        %3153 = vmatpush1.bf16.msra.mxu0 0
        %3154 = vmatprep.subr.bf16.mxu0 0
        %3155 = vmatpush1.bf16.msra.mxu0 0
        %3156 = vmatprep.subr.bf16.mxu0 0
        %3157 = vmatpush1.bf16.msra.mxu0 0
        %3158 = vmatprep.subr.bf16.mxu0 0
        %3159 = vmatpush1.bf16.msra.mxu0 0
        %3160 = vmatprep.subr.bf16.mxu0 0
        %3161 = vmatpush1.bf16.msra.mxu0 0
        %3162 = vmatprep.mubr.bf16.mxu0 0
        %3163 = vmatmul.mubr.bf16.gmra.mrb[0].mxu0 %v3058
        %v3164 = vpop.f32.mrb[0].mxu0
        %v3165 = vadd.f32 %v3080, %v3164
        %v3166 = vpop.f32.mrb[0].mxu0
        %v3167 = vpop.f32.mrb[0].mxu0
        %v3168 = vadd.f32 %v3080, %v3167
        %v3169 = vpop.f32.mrb[0].mxu0
        %3170 = vdwg.mxu0
        %3171 = vst [vmem:[%s416] sm:$0xff] %v3165
        %3172 = vst [vmem:[%s416 + $0x8] sm:$0xff] %v3168
        %s3173 = sand.u32 %s230, 1
        %s3174 = scalar_lea.sflag [#allocation5], %s3173
        %s3175 = sand.u32 %s230, 1
        %s3176 = smul.addr %s3175, 16
        %s3177 = scalar_lea.vmem [#allocation12], %s3176
        // Predicated region
        $region77: #{tpu_custom_call.1} parent=55 // pred_check
          %p3178 = pneg %p240
        $region78: #{tpu_custom_call.1} parent=55 // pred_check_branch
          %3180 = sbr.rel (%p3178) target = $region80
        $region79: #{tpu_custom_call.1} parent=55 // pred_region
          %s3181 = smul.u32 2, %s28
          %s3182 = ssub.s32 3, %s3181
          %p3183 = scmp.lt.s32.totalorder %s3182, 2
          %s3184 = scalar_select %p3183, %s3182, 2
          %s3185 = smul.u32 128, %s3184
          %s3187 = ssub.s32 256, %s3185
          %3188 = vsyncadd %s3174, %s3187
          %p3189 = scmp.ne.s32.totalorder 0, %s3185
          %s3190 = smul.addr %s3181, 128
          %s3191 = scalar_lea.hbm %s9, %s3190
          %s3192 = smul.u32 8, %s3184
          %s3193 = sshll.u32 %s3177, 4
          %s3194 = int_to_ptr.vmem [resolvable:$true] %s3193
          %s3195 = sshll.u32 %s3192, 4
          %3199 = dma.vmem_to_hbm [thread:$0]  (%p3189), %s3194, %s3195, %s3191, %s3174, 128, 128, 8
        $region80: #{tpu_custom_call.1} parent=55 // pred_fallthru
          _
      $region56: #{tpu_custom_call.1} parent=5 // pred_fallthru
        _
      %p3200 = scmp.le.s32.totalorder 2, %s23
      // Predicated region
      $region81: #{tpu_custom_call.1} parent=5 // pred_check
        %p3201 = pneg %p3200
      $region82: #{tpu_custom_call.1} parent=5 // pred_check_branch
        %3203 = sbr.rel (%p3201) target = $region84
      $region83: #{tpu_custom_call.1} parent=5 // pred_region
        %s3204 = ssub.s32 %s23, 2
        // Predicated region
        $region85: #{tpu_custom_call.1} parent=83 // pred_check
          %p3205 = pneg %p246
        $region86: #{tpu_custom_call.1} parent=83 // pred_check_branch
          %3207 = sbr.rel (%p3205) target = $region88
        $region87: #{tpu_custom_call.1} parent=83 // pred_region
          %s3208 = sand.u32 %s231, 1
          %s3209 = scalar_lea.sflag [#allocation5], %s3208
          %s3210 = sand.u32 %s231, 1
          %s3211 = smul.addr %s3210, 16
          %s3212 = scalar_lea.vmem [#allocation12], %s3211
          %3213 = dma.done %s3209, 256
        $region88: #{tpu_custom_call.1} parent=83 // pred_fallthru
          _
      $region84: #{tpu_custom_call.1} parent=5 // pred_fallthru
        _
    $region6: #{tpu_custom_call.1} parent=1 // loop_footer
      %s27 = sadd.s32 1, %s23
    $region7: #{tpu_custom_call.1} parent=1 // loop_footer_branch
      %22 = sbr.rel target = $region3
    $region8: #{tpu_custom_call.1} parent=1 // loop_exit
      _
    %3214 = vsyncpa [#allocation4], 1
    %s3215 = scalar_lea.sflag [#allocation4], 1
    %3216 = vsyncpa %s3215, 1
    %3217 = vsyncpa [#allocation7], 1
    %3218 = vsyncpa [#allocation10], 1
    %3219 = vsyncpa [#allocation5], 1
    %s3220 = scalar_lea.sflag [#allocation5], 1
    %3221 = vsyncpa %s3220, 1

</llo_original>
